<compile_context>
chip_gen: v7x
topology: tpu7x:2x2x1
jax: 0.10.0
libtpu: 0.0.40
codegen_flags: <defaults>
</compile_context>

<pallas_src>
import jax
import jax.numpy as jnp
from jax.experimental import pallas as pl
from jax.experimental.pallas import tpu as pltpu

KH = KW = 3
EPS = 1e-5          # nn.BatchNorm2d default eps
LANES = 128


def _pick_b_tile(N, HW, K, Cpad, C8, budget_bytes=24 << 20):
    """Largest divisor of N whose per-step VMEM working set fits the budget."""
    best = 1
    for bt in range(1, N + 1):
        if N % bt:
            continue
        if (bt * HW) % 8 and bt != N:        # keep the block sublane-aligned
            continue
        need = (3 * bt * HW * K * 2          # patches block (bf16), buffered
                + 2 * bt * C8 * HW * 4       # output block (f32), double buffered
                + 4 * bt * HW * Cpad * 4)    # f32 acc / BN / transpose temporaries
        if need <= budget_bytes:
            best = bt
    return best


def conv_block_forward(x_nchw, w_oihw, b, gamma, beta):
    N, Cin, H, W = x_nchw.shape
    Cout = w_oihw.shape[0]
    K = KH * KW * Cin
    Cpad = ((Cout + LANES - 1) // LANES) * LANES   # lane-dense matmul N dim
    C8 = ((Cout + 7) // 8) * 8                     # sublane-rounded output channels
    HW = H * W
    inv_count = 1.0 / (N * H * W)

    B_TILE = _pick_b_tile(N, HW, K, Cpad, C8)
    NT = N // B_TILE

    # ---------- wrapper-side layout plumbing (no FLOPs) ----------
    # NCHW -> NHWC, zero-pad spatially, im2col the 3x3 taps into the K axis.
    # TODO(synk): for v5e/v6e at production shapes, build the 9 taps in-kernel from raw
    # padded NHWC rows (halo DMA + shifted reads) instead of materializing the
    # 9x-inflated patches array in HBM.
    x = jnp.transpose(x_nchw, (0, 2, 3, 1))
    x_pad = jnp.pad(x, ((0, 0), (1, 1), (1, 1), (0, 0)))
    taps = [x_pad[:, kh:kh + H, kw:kw + W, :]
            for kh in range(KH) for kw in range(KW)]
    patches = jnp.stack(taps, axis=3).reshape(N * HW, K).astype(jnp.bfloat16)

    # Weight (O,I,KH,KW) -> (KH*KW*Cin, Cout), zero-pad channels to 128 lanes.
    w_k = jnp.transpose(w_oihw, (2, 3, 1, 0)).reshape(K, Cout)
    w_k = jnp.pad(w_k, ((0, 0), (0, Cpad - Cout))).astype(jnp.bfloat16)
    b_p = jnp.pad(b, (0, Cpad - Cout)).reshape(1, Cpad).astype(jnp.float32)
    g_p = jnp.pad(gamma, (0, Cpad - Cout)).reshape(1, Cpad).astype(jnp.float32)
    bt_p = jnp.pad(beta, (0, Cpad - Cout)).reshape(1, Cpad).astype(jnp.float32)

    # Explicit VMEM budget (buffered patches + output blocks + weights + f32 temps),
    # with headroom; capped at v7x's 64 MiB physical VMEM per TensorCore.
    vmem_limit = int(max(16 << 20, min(64 << 20,
        3 * B_TILE * HW * K * 2 + 2 * B_TILE * C8 * HW * 4
        + K * Cpad * 2 + 4 * B_TILE * HW * Cpad * 4 + (4 << 20))))

    def kernel(p_ref, w_ref, b_ref, g_ref, bt_ref, o_ref, stats_sc, coef_sc):
        phase = pl.program_id(0)
        n = pl.program_id(1)

        def conv():
            # One big-K bf16 MXU matmul, f32 accumulation.
            acc = jnp.dot(p_ref[...], w_ref[...],
                          preferred_element_type=jnp.float32)
            return acc + b_ref[...]                      # (B_TILE*HW, Cpad) f32

        @pl.when(phase == 0)          # ---- conv + per-channel batch statistics ----
        def _conv_and_stats():
            @pl.when(n == 0)
            def _():
                stats_sc[...] = jnp.zeros_like(stats_sc)
            acc = conv()
            # Two plain row updates (no per-step stack / relayout).
            stats_sc[0:1, :] = stats_sc[0:1, :] + jnp.sum(acc, axis=0, keepdims=True)
            stats_sc[1:2, :] = stats_sc[1:2, :] + jnp.sum(acc * acc, axis=0,
                                                          keepdims=True)

        @pl.when(phase == 1)          # ---- BN affine + ReLU (conv recomputed) ----
        def _bn_relu():
            @pl.when(n == 0)
            def _():
                # TODO(synk): sum/sumsq variance is cancellation-prone for very large
                # N*H*W; use per-tile means + a centered second pass (Welford) there.
                mean = stats_sc[0:1, :] * inv_count
                var = jnp.maximum(stats_sc[1:2, :] * inv_count - mean * mean, 0.0)
                scale = g_ref[...] * jax.lax.rsqrt(var + EPS)
                coef_sc[0:1, :] = scale
                coef_sc[1:2, :] = bt_ref[...] - mean * scale

            y = jnp.maximum(conv() * coef_sc[0:1, :] + coef_sc[1:2, :], 0.0)
            # XLU transpose -> HW becomes the lane dim; store only the C8 real-channel
            # sublanes (16x fewer HBM bytes than a 128-lane-padded channel layout).
            y_t = y.T                                    # (Cpad, B_TILE*HW) f32
            for i in range(B_TILE):                      # static unroll
                o_ref[i] = y_t[:C8, i * HW:(i + 1) * HW]

    out = pl.pallas_call(
        kernel,
        out_shape=jax.ShapeDtypeStruct((N, C8, HW), jnp.float32),
        grid=(2, NT),                                    # (phase, batch tile)
        in_specs=[
            # Both phases stream the same row-strip (phase 1 recomputes the conv).
            pl.BlockSpec((B_TILE * HW, K), lambda p, n: (n, 0)),
            pl.BlockSpec((K, Cpad), lambda p, n: (0, 0)),
            pl.BlockSpec((1, Cpad), lambda p, n: (0, 0)),
            pl.BlockSpec((1, Cpad), lambda p, n: (0, 0)),
            pl.BlockSpec((1, Cpad), lambda p, n: (0, 0)),
        ],
        # Output is written only in phase 1.  During phase 0 the index stays pinned to
        # block 0, so Pallas never flushes an untouched block (implicit contract: an
        # output block is only written back when its block index changes / at the end).
        out_specs=pl.BlockSpec((B_TILE, C8, HW), lambda p, n: (n * p, 0, 0)),
        scratch_shapes=[
            pltpu.VMEM((2, Cpad), jnp.float32),          # per-channel sum / sumsq
            pltpu.VMEM((2, Cpad), jnp.float32),          # BN scale / shift
        ],
        compiler_params=pltpu.CompilerParams(
            # Batch statistics couple every image, so both axes stay serialized.
            # TODO(synk): on v7x, split the batch axis across the two TensorCores with
            # per-core partial sum/sumsq merged via CMEM + a core barrier.
            dimension_semantics=("arbitrary", "arbitrary"),
            vmem_limit_bytes=vmem_limit),
    )(patches, w_k, b_p, g_p, bt_p)

    # (N, C8, HW) -> NCHW; slice + reshape only (no full transpose pass).
    return out[:, :Cout, :].reshape(N, Cout, H, W)


def reference(x, w, b, gamma, beta):
    # pure-JAX reference mirroring PyTorch F.relu(bn(conv(x))) in training mode
    y = jax.lax.conv_general_dilated(
        x, w, window_strides=(1, 1), padding=((1, 1), (1, 1)),
        dimension_numbers=("NCHW", "OIHW", "NCHW"))
    y = y + b.reshape(1, -1, 1, 1)
    mean = jnp.mean(y, axis=(0, 2, 3), keepdims=True)
    var = jnp.mean((y - mean) ** 2, axis=(0, 2, 3), keepdims=True)
    yn = (y - mean) / jnp.sqrt(var + EPS)
    yn = yn * gamma.reshape(1, -1, 1, 1) + beta.reshape(1, -1, 1, 1)
    return jnp.maximum(yn, 0.0)


if __name__ == "__main__":
    key = jax.random.PRNGKey(0)
    k1, k2, k3, k4, k5 = jax.random.split(key, 5)

    N, Cin, H, W = 2, 4, 16, 16   # x: (2, 4, 16, 16) NCHW, as in PyTorch
    Cout = 8                      # ConvBlock(ch_in=4, ch_out=8)

    x = jax.random.normal(k1, (N, Cin, H, W), jnp.float32)
    fan_in = Cin * KH * KW
    w = jax.random.normal(k2, (Cout, Cin, KH, KW), jnp.float32) / jnp.sqrt(fan_in)
    b = 0.1 * jax.random.normal(k3, (Cout,), jnp.float32)
    gamma = 1.0 + 0.1 * jax.random.normal(k4, (Cout,), jnp.float32)
    beta = 0.1 * jax.random.normal(k5, (Cout,), jnp.float32)

    # Quantize the matmul operands to bf16-representable values once, so the bf16-MXU
    # kernel and the f32 reference consume identical inputs (keeps the check tight).
    x = x.astype(jnp.bfloat16).astype(jnp.float32)
    w = w.astype(jnp.bfloat16).astype(jnp.float32)

    out = conv_block_forward(x, w, b, gamma, beta)
    out = jax.block_until_ready(out)

    ref = reference(x, w, b, gamma, beta)
    assert out.shape == (N, Cout, H, W)
    err = float(jnp.max(jnp.abs(out - ref)))
    assert jnp.allclose(out, ref, atol=1e-3, rtol=1e-3), err
    print("KERNEL_OK")
</pallas_src>

<mosaic_0001>
module attributes {stable_mosaic.version = 11 : i64} {
  func.func @kernel(%arg0: i32, %arg1: i32, %arg2: memref<512x36xbf16, #tpu.memory_space<vmem>>, %arg3: memref<36x128xbf16, #tpu.memory_space<vmem>>, %arg4: memref<1x128xf32, #tpu.memory_space<vmem>>, %arg5: memref<1x128xf32, #tpu.memory_space<vmem>>, %arg6: memref<1x128xf32, #tpu.memory_space<vmem>>, %arg7: memref<2x8x256xf32, #tpu.memory_space<vmem>>, %arg8: memref<2x128xf32, #tpu.memory_space<vmem>>, %arg9: memref<2x128xf32, #tpu.memory_space<vmem>>) attributes {dimension_semantics = [#tpu.dimension_semantics<arbitrary>, #tpu.dimension_semantics<arbitrary>], iteration_bounds = array<i64: 2, 1>, scalar_prefetch = 0 : i64, scratch_operands = 2 : i64, tpu.core_type = #tpu.core_type<tc>, window_params = [{transform_indices = @transform_0, window_bounds = array<i64: 512, 36>}, {pipeline_mode = #tpu.pipeline_mode<synchronous>, transform_indices = @transform_1, window_bounds = array<i64: 36, 128>}, {pipeline_mode = #tpu.pipeline_mode<synchronous>, transform_indices = @transform_2, window_bounds = array<i64: 1, 128>}, {pipeline_mode = #tpu.pipeline_mode<synchronous>, transform_indices = @transform_3, window_bounds = array<i64: 1, 128>}, {pipeline_mode = #tpu.pipeline_mode<synchronous>, transform_indices = @transform_4, window_bounds = array<i64: 1, 128>}, {transform_indices = @transform_5, window_bounds = array<i64: 2, 8, 256>}]} {
    %c0_i32 = arith.constant 0 : i32
    %0 = arith.cmpi eq, %arg0, %c0_i32 : i32
    %1 = arith.extui %0 : i1 to i32
    %c0_i32_0 = arith.constant 0 : i32
    %2 = arith.cmpi ne, %1, %c0_i32_0 : i32
    scf.if %2 {
      %c0_i32_2 = arith.constant 0 : i32
      %6 = arith.cmpi eq, %arg1, %c0_i32_2 : i32
      %7 = arith.extui %6 : i1 to i32
      %c0_i32_3 = arith.constant 0 : i32
      %8 = arith.cmpi ne, %7, %c0_i32_3 : i32
      scf.if %8 {
        %cst_18 = arith.constant 0.000000e+00 : f32
        %26 = vector.broadcast %cst_18 : f32 to vector<2x128xf32>
        %c0_19 = arith.constant 0 : index
        %c0_20 = arith.constant 0 : index
        %27 = vector.load %arg8[%c0_19, %c0_20] : memref<2x128xf32, #tpu.memory_space<vmem>>, vector<2x128xf32>
        tpu.vector_store %arg8[%c0_19, %c0_20], %26 {strides = array<i32>} : memref<2x128xf32, #tpu.memory_space<vmem>>, vector<2x128xf32>,
      } else {
      }
      %c0 = arith.constant 0 : index
      %c0_4 = arith.constant 0 : index
      %9 = vector.load %arg2[%c0, %c0_4] : memref<512x36xbf16, #tpu.memory_space<vmem>>, vector<512x36xbf16>
      %c0_5 = arith.constant 0 : index
      %c0_6 = arith.constant 0 : index
      %10 = vector.load %arg3[%c0_5, %c0_6] : memref<36x128xbf16, #tpu.memory_space<vmem>>, vector<36x128xbf16>
      %cst = arith.constant dense<0.000000e+00> : vector<512x128xf32>
      %11 = tpu.matmul %9, %10, %cst {dimension_numbers = #tpu.dot_dimension_numbers<[1], [0], [0], [1], [0, 0, 1, 1], [], []>} : vector<512x36xbf16>, vector<36x128xbf16>, vector<512x128xf32> -> vector<512x128xf32>
      %c0_7 = arith.constant 0 : index
      %c0_8 = arith.constant 0 : index
      %12 = vector.load %arg4[%c0_7, %c0_8] : memref<1x128xf32, #tpu.memory_space<vmem>>, vector<1x128xf32>
      %13 = vector.broadcast %12 : vector<1x128xf32> to vector<512x128xf32>
      %14 = arith.addf %11, %13 : vector<512x128xf32>
      %c0_9 = arith.constant 0 : index
      %c0_10 = arith.constant 0 : index
      %15 = vector.load %arg8[%c0_9, %c0_10] : memref<2x128xf32, #tpu.memory_space<vmem>>, vector<1x128xf32>
      %cst_11 = arith.constant dense<0.000000e+00> : vector<128xf32>
      %16 = vector.multi_reduction <add>, %14, %cst_11 [0] : vector<512x128xf32> to vector<128xf32>
      %17 = vector.shape_cast %16 : vector<128xf32> to vector<1x128xf32>
      %18 = arith.addf %15, %17 : vector<1x128xf32>
      %c0_12 = arith.constant 0 : index
      %c0_13 = arith.constant 0 : index
      %19 = vector.load %arg8[%c0_12, %c0_13] : memref<2x128xf32, #tpu.memory_space<vmem>>, vector<1x128xf32>
      tpu.vector_store %arg8[%c0_12, %c0_13], %18 {strides = array<i32>} : memref<2x128xf32, #tpu.memory_space<vmem>>, vector<1x128xf32>,
      %c1 = arith.constant 1 : index
      %c0_14 = arith.constant 0 : index
      %20 = vector.load %arg8[%c1, %c0_14] : memref<2x128xf32, #tpu.memory_space<vmem>>, vector<1x128xf32>
      %21 = arith.mulf %14, %14 : vector<512x128xf32>
      %cst_15 = arith.constant dense<0.000000e+00> : vector<128xf32>
      %22 = vector.multi_reduction <add>, %21, %cst_15 [0] : vector<512x128xf32> to vector<128xf32>
      %23 = vector.shape_cast %22 : vector<128xf32> to vector<1x128xf32>
      %24 = arith.addf %20, %23 : vector<1x128xf32>
      %c1_16 = arith.constant 1 : index
      %c0_17 = arith.constant 0 : index
      %25 = vector.load %arg8[%c1_16, %c0_17] : memref<2x128xf32, #tpu.memory_space<vmem>>, vector<1x128xf32>
      tpu.vector_store %arg8[%c1_16, %c0_17], %24 {strides = array<i32>} : memref<2x128xf32, #tpu.memory_space<vmem>>, vector<1x128xf32>,
    } else {
    }
    %c1_i32 = arith.constant 1 : i32
    %3 = arith.cmpi eq, %arg0, %c1_i32 : i32
    %4 = arith.extui %3 : i1 to i32
    %c0_i32_1 = arith.constant 0 : i32
    %5 = arith.cmpi ne, %4, %c0_i32_1 : i32
    scf.if %5 {
      %c0_i32_2 = arith.constant 0 : i32
      %6 = arith.cmpi eq, %arg1, %c0_i32_2 : i32
      %7 = arith.extui %6 : i1 to i32
      %c0_i32_3 = arith.constant 0 : i32
      %8 = arith.cmpi ne, %7, %c0_i32_3 : i32
      scf.if %8 {
        %c0_19 = arith.constant 0 : index
        %c0_20 = arith.constant 0 : index
        %32 = vector.load %arg8[%c0_19, %c0_20] : memref<2x128xf32, #tpu.memory_space<vmem>>, vector<1x128xf32>
        %cst_21 = arith.constant 0.001953125 : f32
        %33 = vector.broadcast %cst_21 : f32 to vector<1x128xf32>
        %34 = arith.mulf %32, %33 : vector<1x128xf32>
        %c1_22 = arith.constant 1 : index
        %c0_23 = arith.constant 0 : index
        %35 = vector.load %arg8[%c1_22, %c0_23] : memref<2x128xf32, #tpu.memory_space<vmem>>, vector<1x128xf32>
        %cst_24 = arith.constant 0.001953125 : f32
        %36 = vector.broadcast %cst_24 : f32 to vector<1x128xf32>
        %37 = arith.mulf %35, %36 : vector<1x128xf32>
        %38 = arith.mulf %34, %34 : vector<1x128xf32>
        %39 = arith.subf %37, %38 : vector<1x128xf32>
        %cst_25 = arith.constant 0.000000e+00 : f32
        %40 = vector.broadcast %cst_25 : f32 to vector<1x128xf32>
        %41 = arith.maximumf %39, %40 : vector<1x128xf32>
        %c0_26 = arith.constant 0 : index
        %c0_27 = arith.constant 0 : index
        %42 = vector.load %arg5[%c0_26, %c0_27] : memref<1x128xf32, #tpu.memory_space<vmem>>, vector<1x128xf32>
        %cst_28 = arith.constant 9.99999974E-6 : f32
        %43 = vector.broadcast %cst_28 : f32 to vector<1x128xf32>
        %44 = arith.addf %41, %43 : vector<1x128xf32>
        %45 = math.rsqrt %44 : vector<1x128xf32>
        %46 = arith.mulf %42, %45 : vector<1x128xf32>
        %c0_29 = arith.constant 0 : index
        %c0_30 = arith.constant 0 : index
        %47 = vector.load %arg9[%c0_29, %c0_30] : memref<2x128xf32, #tpu.memory_space<vmem>>, vector<1x128xf32>
        tpu.vector_store %arg9[%c0_29, %c0_30], %46 {strides = array<i32>} : memref<2x128xf32, #tpu.memory_space<vmem>>, vector<1x128xf32>,
        %c0_31 = arith.constant 0 : index
        %c0_32 = arith.constant 0 : index
        %48 = vector.load %arg6[%c0_31, %c0_32] : memref<1x128xf32, #tpu.memory_space<vmem>>, vector<1x128xf32>
        %49 = arith.mulf %34, %46 : vector<1x128xf32>
        %50 = arith.subf %48, %49 : vector<1x128xf32>
        %c1_33 = arith.constant 1 : index
        %c0_34 = arith.constant 0 : index
        %51 = vector.load %arg9[%c1_33, %c0_34] : memref<2x128xf32, #tpu.memory_space<vmem>>, vector<1x128xf32>
        tpu.vector_store %arg9[%c1_33, %c0_34], %50 {strides = array<i32>} : memref<2x128xf32, #tpu.memory_space<vmem>>, vector<1x128xf32>,
      } else {
      }
      %c0 = arith.constant 0 : index
      %c0_4 = arith.constant 0 : index
      %9 = vector.load %arg2[%c0, %c0_4] : memref<512x36xbf16, #tpu.memory_space<vmem>>, vector<512x36xbf16>
      %c0_5 = arith.constant 0 : index
      %c0_6 = arith.constant 0 : index
      %10 = vector.load %arg3[%c0_5, %c0_6] : memref<36x128xbf16, #tpu.memory_space<vmem>>, vector<36x128xbf16>
      %cst = arith.constant dense<0.000000e+00> : vector<512x128xf32>
      %11 = tpu.matmul %9, %10, %cst {dimension_numbers = #tpu.dot_dimension_numbers<[1], [0], [0], [1], [0, 0, 1, 1], [], []>} : vector<512x36xbf16>, vector<36x128xbf16>, vector<512x128xf32> -> vector<512x128xf32>
      %c0_7 = arith.constant 0 : index
      %c0_8 = arith.constant 0 : index
      %12 = vector.load %arg4[%c0_7, %c0_8] : memref<1x128xf32, #tpu.memory_space<vmem>>, vector<1x128xf32>
      %13 = vector.broadcast %12 : vector<1x128xf32> to vector<512x128xf32>
      %14 = arith.addf %11, %13 : vector<512x128xf32>
      %c0_9 = arith.constant 0 : index
      %c0_10 = arith.constant 0 : index
      %15 = vector.load %arg9[%c0_9, %c0_10] : memref<2x128xf32, #tpu.memory_space<vmem>>, vector<1x128xf32>
      %16 = vector.broadcast %15 : vector<1x128xf32> to vector<512x128xf32>
      %17 = arith.mulf %14, %16 : vector<512x128xf32>
      %c1 = arith.constant 1 : index
      %c0_11 = arith.constant 0 : index
      %18 = vector.load %arg9[%c1, %c0_11] : memref<2x128xf32, #tpu.memory_space<vmem>>, vector<1x128xf32>
      %19 = vector.broadcast %18 : vector<1x128xf32> to vector<512x128xf32>
      %20 = arith.addf %17, %19 : vector<512x128xf32>
      %cst_12 = arith.constant 0.000000e+00 : f32
      %21 = vector.broadcast %cst_12 : f32 to vector<512x128xf32>
      %22 = arith.maximumf %20, %21 : vector<512x128xf32>
      %23 = tpu.transpose %22, [1, 0] : vector<512x128xf32> -> vector<128x512xf32>
      %24 = vector.extract_strided_slice %23 {offsets = [0, 0], sizes = [8, 256], strides = [1, 1]} : vector<128x512xf32> to vector<8x256xf32>
      %c0_13 = arith.constant 0 : index
      %c0_14 = arith.constant 0 : index
      %c0_15 = arith.constant 0 : index
      %25 = vector.load %arg7[%c0_13, %c0_14, %c0_15] : memref<2x8x256xf32, #tpu.memory_space<vmem>>, vector<1x8x256xf32>
      %26 = vector.shape_cast %25 : vector<1x8x256xf32> to vector<8x256xf32>
      %27 = vector.shape_cast %24 : vector<8x256xf32> to vector<1x8x256xf32>
      tpu.vector_store %arg7[%c0_13, %c0_14, %c0_15], %27 {strides = array<i32>} : memref<2x8x256xf32, #tpu.memory_space<vmem>>, vector<1x8x256xf32>,
      %28 = vector.extract_strided_slice %23 {offsets = [0, 256], sizes = [8, 256], strides = [1, 1]} : vector<128x512xf32> to vector<8x256xf32>
      %c1_16 = arith.constant 1 : index
      %c0_17 = arith.constant 0 : index
      %c0_18 = arith.constant 0 : index
      %29 = vector.load %arg7[%c1_16, %c0_17, %c0_18] : memref<2x8x256xf32, #tpu.memory_space<vmem>>, vector<1x8x256xf32>
      %30 = vector.shape_cast %29 : vector<1x8x256xf32> to vector<8x256xf32>
      %31 = vector.shape_cast %28 : vector<8x256xf32> to vector<1x8x256xf32>
      tpu.vector_store %arg7[%c1_16, %c0_17, %c0_18], %31 {strides = array<i32>} : memref<2x8x256xf32, #tpu.memory_space<vmem>>, vector<1x8x256xf32>,
    } else {
    }
    return
  }
  func.func @transform_0(%arg0: i32, %arg1: i32) -> (i32, i32) {
    %c0_i32 = arith.constant 0 : i32
    %c0_i32_0 = arith.constant 0 : i32
    return %arg1, %c0_i32 : i32, i32
  }
  func.func @transform_1(%arg0: i32, %arg1: i32) -> (i32, i32) {
    %c0_i32 = arith.constant 0 : i32
    %c0_i32_0 = arith.constant 0 : i32
    %c0_i32_1 = arith.constant 0 : i32
    return %c0_i32, %c0_i32_0 : i32, i32
  }
  func.func @transform_2(%arg0: i32, %arg1: i32) -> (i32, i32) {
    %c0_i32 = arith.constant 0 : i32
    %c0_i32_0 = arith.constant 0 : i32
    %c0_i32_1 = arith.constant 0 : i32
    return %c0_i32, %c0_i32_0 : i32, i32
  }
  func.func @transform_3(%arg0: i32, %arg1: i32) -> (i32, i32) {
    %c0_i32 = arith.constant 0 : i32
    %c0_i32_0 = arith.constant 0 : i32
    %c0_i32_1 = arith.constant 0 : i32
    return %c0_i32, %c0_i32_0 : i32, i32
  }
  func.func @transform_4(%arg0: i32, %arg1: i32) -> (i32, i32) {
    %c0_i32 = arith.constant 0 : i32
    %c0_i32_0 = arith.constant 0 : i32
    %c0_i32_1 = arith.constant 0 : i32
    return %c0_i32, %c0_i32_0 : i32, i32
  }
  func.func @transform_5(%arg0: i32, %arg1: i32) -> (i32, i32, i32) {
    %0 = arith.muli %arg1, %arg0 : i32
    %c0_i32 = arith.constant 0 : i32
    %c0_i32_0 = arith.constant 0 : i32
    %c0_i32_1 = arith.constant 0 : i32
    return %0, %c0_i32, %c0_i32_0 : i32, i32, i32
  }
}

</mosaic_0001>

<llo_original>
// kernel: tpu_custom_call.1
$region0: #{tpu_custom_call.1}
  #allocation0 [shape = 'u32[]', space=smem, size = 0x4, offset = 0x4, fixed_abs, tag = 'smem constant byte address 0x4 - core index']
  #allocation1 [shape = 'u32[144,128]{1,0:T(1,128)}', space=vmem, size = 0x12000, scoped, tag = 'internal scratch']
  #allocation2 [shape = 'f32[2,128]{1,0:T(2,128)}', space=vmem, size = 0x400, scoped, tag = 'scratch operand']
  #allocation3 [shape = 'f32[2,128]{1,0:T(2,128)}', space=vmem, size = 0x400, scoped, tag = 'scratch operand']
  %s0 = inlined_call_operand.vmem [shape: bf16[512,36], index: 0, kind: input, shape index: {}]
  %s1 = inlined_call_operand.vmem [shape: bf16[36,128], index: 1, kind: input, shape index: {}]
  %s2 = inlined_call_operand.vmem [shape: f32[1,128], index: 2, kind: input, shape index: {}]
  %s3 = inlined_call_operand.vmem [shape: f32[1,128], index: 3, kind: input, shape index: {}]
  %s4 = inlined_call_operand.vmem [shape: f32[1,128], index: 4, kind: input, shape index: {}]
  %s5 = inlined_call_operand.hbm [shape: f32[2,8,256], index: 5, kind: output, shape index: {}]
  %s6 = sld [smem:[#allocation0]]
  $region69: #{tpu_custom_call.1} parent=0
    _
  %s8 = ssub.s32 1, %s6
  %s9 = scalar_select 0, %s8, %s6
  $region1: #{tpu_custom_call.1} parent=0
    #allocation4 [shape = 'u8[32768]{0}', space=vmem, size = 0x8000, scoped, tag = 'output window, operand 0']
    #allocation5 [shape = 's32[2]{0}', space=sflag, size = 0x8, scoped, tag = 'scoped memory for tpu_custom_call.1']
    %10 = vsyncpa [#allocation5], 0
    %s11 = scalar_lea.sflag [#allocation5], 1
    %12 = vsyncpa %s11, 0
    loop: start=0, step=1, limit=4
    $region2: #{tpu_custom_call.1} parent=1 // loop_pre_header
      _
    $region3: #{tpu_custom_call.1} parent=1 // loop_header
      %s14 = sphi 0, %s18
      %p15 = scmp.ge.s32.totalorder %s14, 4
      %s21 = sphi 0, %s33
      %s22 = sphi 0, %s29
      %s23 = sphi 0, %s21
      %s24 = sphi 0, %s22
      %s25 = sphi 0, %s23
      %s26 = sphi 0, %s24
      %s36 = sphi 0, %s38
      %s39 = sphi 0, %s36
      %s40 = sphi 0, %s39
      %s56 = sphi 0, %s40
      %s60 = sphi 0, %s60
      %s62 = sphi 0, %s60
      %s63 = sphi 0, %s62
      %s77 = sphi 0, %s63
      %s81 = sphi 0, %s81
      %s83 = sphi 0, %s81
      %s84 = sphi 0, %s83
      %s98 = sphi 0, %s84
      %s102 = sphi 0, %s102
      %s104 = sphi 0, %s102
      %s105 = sphi 0, %s104
      %s119 = sphi 0, %s105
      %s123 = sphi 0, %s123
      %s125 = sphi 0, %s123
      %s126 = sphi 0, %s125
      %s140 = sphi 0, %s126
      %s148 = sphi 0, %s150
      %s151 = sphi 0, %s148
      %s152 = sphi 0, %s151
      %s168 = sphi 0, %s152
    $region4: #{tpu_custom_call.1} parent=1 // loop_header_branch
      %17 = sbr.rel (%p15) target = $region8
    $region5: #{tpu_custom_call.1} parent=1 // loop_body
      %s19 = ssub.s32 %s14, 1
      %s20 = ssub.s32 %s14, 2
      %s27 = sadd.s32 1, %s22
      %p28 = scmp.ge.s32.totalorder %s27, 1
      %s29 = scalar_select %p28, 0, %s27
      %s30 = sadd.s32 1, %s21
      %s31 = scalar_select %p28, %s30, %s21
      %p32 = scmp.ge.s32.totalorder %s31, 2
      %s33 = scalar_select %p32, 0, %s31
      %s34 = ssub.s32 %s22, %s29
      %p35 = scmp.eq.s32.totalorder %s34, 0
      %s37 = sadd.s32 %s36, 1
      %s38 = scalar_select %p35, %s36, %s37
      %p41 = pneg %p35
      %p42 = scmp.eq.s32.totalorder %s14, 1
      %p43 = por %p41, %p42
      %p44 = scmp.ne.s32.totalorder %s36, %s39
      %p45 = scmp.eq.s32.totalorder %s14, 0
      %p46 = por %p44, %p45
      %p47 = scmp.ne.s32.totalorder %s36, %s39
      %p48 = scmp.eq.s32.totalorder %s19, 1
      %p49 = por %p47, %p48
      %p50 = scmp.ne.s32.totalorder %s39, %s40
      %p51 = scmp.eq.s32.totalorder %s19, 0
      %p52 = por %p50, %p51
      %p53 = scmp.ne.s32.totalorder %s39, %s40
      %p54 = scmp.eq.s32.totalorder %s20, 1
      %p55 = por %p53, %p54
      %p57 = scmp.ne.s32.totalorder %s40, %s56
      %p58 = scmp.eq.s32.totalorder %s20, 0
      %p59 = por %p57, %p58
      %s61 = sadd.s32 %s60, 1
      %p64 = scmp.eq.s32.totalorder %s14, 1
      %p65 = scmp.ne.s32.totalorder %s60, %s62
      %p66 = scmp.eq.s32.totalorder %s14, 0
      %p67 = por %p65, %p66
      %p68 = scmp.ne.s32.totalorder %s60, %s62
      %p69 = scmp.eq.s32.totalorder %s19, 1
      %p70 = por %p68, %p69
      %p71 = scmp.ne.s32.totalorder %s62, %s63
      %p72 = scmp.eq.s32.totalorder %s19, 0
      %p73 = por %p71, %p72
      %p74 = scmp.ne.s32.totalorder %s62, %s63
      %p75 = scmp.eq.s32.totalorder %s20, 1
      %p76 = por %p74, %p75
      %p78 = scmp.ne.s32.totalorder %s63, %s77
      %p79 = scmp.eq.s32.totalorder %s20, 0
      %p80 = por %p78, %p79
      %s82 = sadd.s32 %s81, 1
      %p85 = scmp.eq.s32.totalorder %s14, 1
      %p86 = scmp.ne.s32.totalorder %s81, %s83
      %p87 = scmp.eq.s32.totalorder %s14, 0
      %p88 = por %p86, %p87
      %p89 = scmp.ne.s32.totalorder %s81, %s83
      %p90 = scmp.eq.s32.totalorder %s19, 1
      %p91 = por %p89, %p90
      %p92 = scmp.ne.s32.totalorder %s83, %s84
      %p93 = scmp.eq.s32.totalorder %s19, 0
      %p94 = por %p92, %p93
      %p95 = scmp.ne.s32.totalorder %s83, %s84
      %p96 = scmp.eq.s32.totalorder %s20, 1
      %p97 = por %p95, %p96
      %p99 = scmp.ne.s32.totalorder %s84, %s98
      %p100 = scmp.eq.s32.totalorder %s20, 0
      %p101 = por %p99, %p100
      %s103 = sadd.s32 %s102, 1
      %p106 = scmp.eq.s32.totalorder %s14, 1
      %p107 = scmp.ne.s32.totalorder %s102, %s104
      %p108 = scmp.eq.s32.totalorder %s14, 0
      %p109 = por %p107, %p108
      %p110 = scmp.ne.s32.totalorder %s102, %s104
      %p111 = scmp.eq.s32.totalorder %s19, 1
      %p112 = por %p110, %p111
      %p113 = scmp.ne.s32.totalorder %s104, %s105
      %p114 = scmp.eq.s32.totalorder %s19, 0
      %p115 = por %p113, %p114
      %p116 = scmp.ne.s32.totalorder %s104, %s105
      %p117 = scmp.eq.s32.totalorder %s20, 1
      %p118 = por %p116, %p117
      %p120 = scmp.ne.s32.totalorder %s105, %s119
      %p121 = scmp.eq.s32.totalorder %s20, 0
      %p122 = por %p120, %p121
      %s124 = sadd.s32 %s123, 1
      %p127 = scmp.eq.s32.totalorder %s14, 1
      %p128 = scmp.ne.s32.totalorder %s123, %s125
      %p129 = scmp.eq.s32.totalorder %s14, 0
      %p130 = por %p128, %p129
      %p131 = scmp.ne.s32.totalorder %s123, %s125
      %p132 = scmp.eq.s32.totalorder %s19, 1
      %p133 = por %p131, %p132
      %p134 = scmp.ne.s32.totalorder %s125, %s126
      %p135 = scmp.eq.s32.totalorder %s19, 0
      %p136 = por %p134, %p135
      %p137 = scmp.ne.s32.totalorder %s125, %s126
      %p138 = scmp.eq.s32.totalorder %s20, 1
      %p139 = por %p137, %p138
      %p141 = scmp.ne.s32.totalorder %s126, %s140
      %p142 = scmp.eq.s32.totalorder %s20, 0
      %p143 = por %p141, %p142
      %s144 = smul.u32 %s22, %s21
      %s145 = smul.u32 %s29, %s33
      %s146 = ssub.s32 %s144, %s145
      %p147 = scmp.eq.s32.totalorder %s146, 0
      %s149 = sadd.s32 %s148, 1
      %s150 = scalar_select %p147, %s148, %s149
      %p153 = pneg %p147
      %p154 = scmp.eq.s32.totalorder %s14, 1
      %p155 = por %p153, %p154
      %p156 = scmp.ne.s32.totalorder %s148, %s151
      %p157 = scmp.eq.s32.totalorder %s14, 0
      %p158 = por %p156, %p157
      %p159 = scmp.ne.s32.totalorder %s148, %s151
      %p160 = scmp.eq.s32.totalorder %s19, 1
      %p161 = por %p159, %p160
      %p162 = scmp.ne.s32.totalorder %s151, %s152
      %p163 = scmp.eq.s32.totalorder %s19, 0
      %p164 = por %p162, %p163
      %p165 = scmp.ne.s32.totalorder %s151, %s152
      %p166 = scmp.eq.s32.totalorder %s20, 1
      %p167 = por %p165, %p166
      %p169 = scmp.ne.s32.totalorder %s152, %s168
      %p170 = scmp.eq.s32.totalorder %s20, 0
      %p171 = por %p169, %p170
      %p172 = scmp.le.s32.totalorder 1, %s14
      %p173 = scmp.lt.s32.totalorder %s14, 3
      %p174 = pnand %p172, %p173
      %p175 = pneg %p174
      // Predicated region
      $region9: #{tpu_custom_call.1} parent=5 // pred_check
        _
      $region10: #{tpu_custom_call.1} parent=5 // pred_check_branch
        %177 = sbr.rel (%p174) target = $region12
      $region11: #{tpu_custom_call.1} parent=5 // pred_region
        %s178 = ssub.s32 %s14, 1
        // Predicated region
        $region13: #{tpu_custom_call.1} parent=11 // pred_check
          %p179 = pneg %p52
        $region14: #{tpu_custom_call.1} parent=11 // pred_check_branch
          %181 = sbr.rel (%p179) target = $region16
        $region15: #{tpu_custom_call.1} parent=11 // pred_region
          %s182 = smul.u32 64, %s24
          %p183 = scmp.lt.s32.totalorder %s182, 63
          %s184 = scalar_select %p183, %s182, 63
          %s185 = smul.addr %s184, 4
          %s186 = scalar_lea.vmem %s0, %s185
          %s187 = smul.u32 64, %s24
        $region16: #{tpu_custom_call.1} parent=11 // pred_fallthru
          _
        // Predicated region
        $region17: #{tpu_custom_call.1} parent=11 // pred_check
          %p188 = pneg %p73
        $region18: #{tpu_custom_call.1} parent=11 // pred_check_branch
          %190 = sbr.rel (%p188) target = $region20
        $region19: #{tpu_custom_call.1} parent=11 // pred_region
          _
        $region20: #{tpu_custom_call.1} parent=11 // pred_fallthru
          _
        // Predicated region
        $region21: #{tpu_custom_call.1} parent=11 // pred_check
          %p191 = pneg %p94
        $region22: #{tpu_custom_call.1} parent=11 // pred_check_branch
          %193 = sbr.rel (%p191) target = $region24
        $region23: #{tpu_custom_call.1} parent=11 // pred_region
          _
        $region24: #{tpu_custom_call.1} parent=11 // pred_fallthru
          _
        // Predicated region
        $region25: #{tpu_custom_call.1} parent=11 // pred_check
          %p194 = pneg %p115
        $region26: #{tpu_custom_call.1} parent=11 // pred_check_branch
          %196 = sbr.rel (%p194) target = $region28
        $region27: #{tpu_custom_call.1} parent=11 // pred_region
          _
        $region28: #{tpu_custom_call.1} parent=11 // pred_fallthru
          _
        // Predicated region
        $region29: #{tpu_custom_call.1} parent=11 // pred_check
          %p197 = pneg %p136
        $region30: #{tpu_custom_call.1} parent=11 // pred_check_branch
          %199 = sbr.rel (%p197) target = $region32
        $region31: #{tpu_custom_call.1} parent=11 // pred_region
          _
        $region32: #{tpu_custom_call.1} parent=11 // pred_fallthru
          _
      $region12: #{tpu_custom_call.1} parent=5 // pred_fallthru
        _
      %p200 = scmp.lt.s32.totalorder %s14, 2
      // Predicated region
      $region33: #{tpu_custom_call.1} parent=5 // pred_check
        %p201 = pneg %p200
      $region34: #{tpu_custom_call.1} parent=5 // pred_check_branch
        %203 = sbr.rel (%p201) target = $region36
      $region35: #{tpu_custom_call.1} parent=5 // pred_region
        _
      $region36: #{tpu_custom_call.1} parent=5 // pred_fallthru
        _
      %p204 = scmp.le.s32.totalorder 1, %s14
      %p205 = scmp.lt.s32.totalorder %s14, 3
      %p206 = pnand %p204, %p205
      %p207 = pneg %p206
      // Predicated region
      $region37: #{tpu_custom_call.1} parent=5 // pred_check
        _
      $region38: #{tpu_custom_call.1} parent=5 // pred_check_branch
        %209 = sbr.rel (%p206) target = $region40
      $region39: #{tpu_custom_call.1} parent=5 // pred_region
        %s210 = ssub.s32 %s14, 1
        %s211 = smul.u32 64, %s24
        %p212 = scmp.lt.s32.totalorder %s211, 63
        %s213 = scalar_select %p212, %s211, 63
        %s214 = smul.addr %s213, 4
        %s215 = scalar_lea.vmem %s0, %s214
        %p216 = pneg %p52
        %p217 = pneg %p49
        %p218 = pneg %p73
        %p219 = pneg %p70
        %p220 = pneg %p94
        %p221 = pneg %p91
        %p222 = pneg %p115
        %p223 = pneg %p112
        %p224 = pneg %p136
        %p225 = pneg %p133
        %p226 = pneg %p164
        %p227 = pneg %p161
        %s228 = sand.u32 %s151, 1
        %s229 = scalar_lea.sflag [#allocation5], %s228
        %s230 = sand.u32 %s151, 1
        %s231 = smul.addr %s230, 32
        %s232 = scalar_lea.vmem [#allocation4], %s231
        %s233 = smul.u32 64, %s24
        %p234 = scmp.lt.s32.totalorder %s233, 63
        %s235 = scalar_select %p234, %s233, 63
        %s236 = smul.addr %s235, 4
        %s237 = scalar_lea.vmem %s0, %s236
        %s238 = smul.u32 64, %s24
        %s239 = smul.u32 %s24, %s23
        %s240 = smul.u32 2, %s239
        %p242 = scmp.eq.s32.totalorder %s23, 0
        // Predicated region
        $region41: #{tpu_custom_call.1} parent=39 // pred_check
          %p243 = pneg %p242
        $region42: #{tpu_custom_call.1} parent=39 // pred_check_branch
          %245 = sbr.rel (%p243) target = $region44
        $region43: #{tpu_custom_call.1} parent=39 // pred_region
          %p246 = scmp.eq.s32.totalorder %s24, 0
          // Predicated region
          $region45: #{tpu_custom_call.1} parent=43 // pred_check
            %p247 = pneg %p246
          $region46: #{tpu_custom_call.1} parent=43 // pred_check_branch
            %249 = sbr.rel (%p247) target = $region48
          $region47: #{tpu_custom_call.1} parent=43 // pred_region
            %250 = vst [vmem:[#allocation2] sm:$0x3] 0.0
          $region48: #{tpu_custom_call.1} parent=43 // pred_fallthru
            _
          %v251 = vld [vmem:[%s237] sm:$0xf]
          %v252 = vld [vmem:[%s237 + $0x4] sm:$0xf]
          %v253 = vld [vmem:[%s237 + $0x8] sm:$0xf]
          %v254 = vld [vmem:[%s237 + $0xc] sm:$0xf]
          %v255 = vld [vmem:[%s237 + $0x10] sm:$0xf]
          %v256 = vld [vmem:[%s237 + $0x14] sm:$0xf]
          %v257 = vld [vmem:[%s237 + $0x18] sm:$0xf]
          %v258 = vld [vmem:[%s237 + $0x1c] sm:$0xf]
          %v259 = vld [vmem:[%s237 + $0x20] sm:$0xf]
          %v260 = vld [vmem:[%s237 + $0x24] sm:$0xf]
          %v261 = vld [vmem:[%s237 + $0x28] sm:$0xf]
          %v262 = vld [vmem:[%s237 + $0x2c] sm:$0xf]
          %v263 = vld [vmem:[%s237 + $0x30] sm:$0xf]
          %v264 = vld [vmem:[%s237 + $0x34] sm:$0xf]
          %v265 = vld [vmem:[%s237 + $0x38] sm:$0xf]
          %v266 = vld [vmem:[%s237 + $0x3c] sm:$0xf]
          %v267 = vld [vmem:[%s237 + $0x40] sm:$0xf]
          %v268 = vld [vmem:[%s237 + $0x44] sm:$0xf]
          %v269 = vld [vmem:[%s237 + $0x48] sm:$0xf]
          %v270 = vld [vmem:[%s237 + $0x4c] sm:$0xf]
          %v271 = vld [vmem:[%s237 + $0x50] sm:$0xf]
          %v272 = vld [vmem:[%s237 + $0x54] sm:$0xf]
          %v273 = vld [vmem:[%s237 + $0x58] sm:$0xf]
          %v274 = vld [vmem:[%s237 + $0x5c] sm:$0xf]
          %v275 = vld [vmem:[%s237 + $0x60] sm:$0xf]
          %v276 = vld [vmem:[%s237 + $0x64] sm:$0xf]
          %v277 = vld [vmem:[%s237 + $0x68] sm:$0xf]
          %v278 = vld [vmem:[%s237 + $0x6c] sm:$0xf]
          %v279 = vld [vmem:[%s237 + $0x70] sm:$0xf]
          %v280 = vld [vmem:[%s237 + $0x74] sm:$0xf]
          %v281 = vld [vmem:[%s237 + $0x78] sm:$0xf]
          %v282 = vld [vmem:[%s237 + $0x7c] sm:$0xf]
          %v283 = vld [vmem:[%s237 + $0x80] sm:$0xf]
          %v284 = vld [vmem:[%s237 + $0x84] sm:$0xf]
          %v285 = vld [vmem:[%s237 + $0x88] sm:$0xf]
          %v286 = vld [vmem:[%s237 + $0x8c] sm:$0xf]
          %v287 = vld [vmem:[%s237 + $0x90] sm:$0xf]
          %v288 = vld [vmem:[%s237 + $0x94] sm:$0xf]
          %v289 = vld [vmem:[%s237 + $0x98] sm:$0xf]
          %v290 = vld [vmem:[%s237 + $0x9c] sm:$0xf]
          %v291 = vld [vmem:[%s237 + $0xa0] sm:$0xf]
          %v292 = vld [vmem:[%s237 + $0xa4] sm:$0xf]
          %v293 = vld [vmem:[%s237 + $0xa8] sm:$0xf]
          %v294 = vld [vmem:[%s237 + $0xac] sm:$0xf]
          %v295 = vld [vmem:[%s237 + $0xb0] sm:$0xf]
          %v296 = vld [vmem:[%s237 + $0xb4] sm:$0xf]
          %v297 = vld [vmem:[%s237 + $0xb8] sm:$0xf]
          %v298 = vld [vmem:[%s237 + $0xbc] sm:$0xf]
          %v299 = vld [vmem:[%s237 + $0xc0] sm:$0xf]
          %v300 = vld [vmem:[%s237 + $0xc4] sm:$0xf]
          %v301 = vld [vmem:[%s237 + $0xc8] sm:$0xf]
          %v302 = vld [vmem:[%s237 + $0xcc] sm:$0xf]
          %v303 = vld [vmem:[%s237 + $0xd0] sm:$0xf]
          %v304 = vld [vmem:[%s237 + $0xd4] sm:$0xf]
          %v305 = vld [vmem:[%s237 + $0xd8] sm:$0xf]
          %v306 = vld [vmem:[%s237 + $0xdc] sm:$0xf]
          %v307 = vld [vmem:[%s237 + $0xe0] sm:$0xf]
          %v308 = vld [vmem:[%s237 + $0xe4] sm:$0xf]
          %v309 = vld [vmem:[%s237 + $0xe8] sm:$0xf]
          %v310 = vld [vmem:[%s237 + $0xec] sm:$0xf]
          %v311 = vld [vmem:[%s237 + $0xf0] sm:$0xf]
          %v312 = vld [vmem:[%s237 + $0xf4] sm:$0xf]
          %v313 = vld [vmem:[%s237 + $0xf8] sm:$0xf]
          %v314 = vld [vmem:[%s237 + $0xfc] sm:$0xf]
          %v315 = vld [vmem:[%s1] sm:$0xf]
          %v316 = vld [vmem:[%s1 + $0x4] sm:$0xf]
          %v317 = vld [vmem:[%s1 + $0x8] sm:$0xf]
          %v318 = vld [vmem:[%s1 + $0xc] sm:$0xf]
          %v319 = vld [vmem:[%s1 + $0x10] sm:$0x3]
          %v320 = vld [vmem:[%s2] sm:$0x1]
          %v322 = vlaneseq
          %v323 = vshrl.u32 %v322, 7
          %v324 = vsub.s32 0, %v323
          %v325 = vrot.slane %v320, %v324
          %v391 = vunpack.c.l.b16 %v251
          %v392 = vunpack.c.l.b16 %v252
          %v393 = vunpack.c.l.b16 %v253
          %v394 = vunpack.c.l.b16 %v254
          %v395 = vunpack.c.l.b16 %v255
          %v396 = vunpack.c.l.b16 %v256
          %v397 = vunpack.c.l.b16 %v257
          %v398 = vunpack.c.l.b16 %v258
          %v399 = vunpack.c.l.b16 %v259
          %v400 = vunpack.c.l.b16 %v260
          %v401 = vunpack.c.l.b16 %v261
          %v402 = vunpack.c.l.b16 %v262
          %v403 = vunpack.c.l.b16 %v263
          %v404 = vunpack.c.l.b16 %v264
          %v405 = vunpack.c.l.b16 %v265
          %v406 = vunpack.c.l.b16 %v266
          %v407 = vunpack.c.l.b16 %v267
          %v408 = vunpack.c.l.b16 %v268
          %v409 = vunpack.c.l.b16 %v269
          %v410 = vunpack.c.l.b16 %v270
          %v411 = vunpack.c.l.b16 %v271
          %v412 = vunpack.c.l.b16 %v272
          %v413 = vunpack.c.l.b16 %v273
          %v414 = vunpack.c.l.b16 %v274
          %v415 = vunpack.c.l.b16 %v275
          %v416 = vunpack.c.l.b16 %v276
          %v417 = vunpack.c.l.b16 %v277
          %v418 = vunpack.c.l.b16 %v278
          %v419 = vunpack.c.l.b16 %v279
          %v420 = vunpack.c.l.b16 %v280
          %v421 = vunpack.c.l.b16 %v281
          %v422 = vunpack.c.l.b16 %v282
          %v423 = vunpack.c.l.b16 %v283
          %v424 = vunpack.c.l.b16 %v284
          %v425 = vunpack.c.l.b16 %v285
          %v426 = vunpack.c.l.b16 %v286
          %v427 = vunpack.c.l.b16 %v287
          %v428 = vunpack.c.l.b16 %v288
          %v429 = vunpack.c.l.b16 %v289
          %v430 = vunpack.c.l.b16 %v290
          %v431 = vunpack.c.l.b16 %v291
          %v432 = vunpack.c.l.b16 %v292
          %v433 = vunpack.c.l.b16 %v293
          %v434 = vunpack.c.l.b16 %v294
          %v435 = vunpack.c.l.b16 %v295
          %v436 = vunpack.c.l.b16 %v296
          %v437 = vunpack.c.l.b16 %v297
          %v438 = vunpack.c.l.b16 %v298
          %v439 = vunpack.c.l.b16 %v299
          %v440 = vunpack.c.l.b16 %v300
          %v441 = vunpack.c.l.b16 %v301
          %v442 = vunpack.c.l.b16 %v302
          %v443 = vunpack.c.l.b16 %v303
          %v444 = vunpack.c.l.b16 %v304
          %v445 = vunpack.c.l.b16 %v305
          %v446 = vunpack.c.l.b16 %v306
          %v447 = vunpack.c.l.b16 %v307
          %v448 = vunpack.c.l.b16 %v308
          %v449 = vunpack.c.l.b16 %v309
          %v450 = vunpack.c.l.b16 %v310
          %v451 = vunpack.c.l.b16 %v311
          %v452 = vunpack.c.l.b16 %v312
          %v453 = vunpack.c.l.b16 %v313
          %v454 = vunpack.c.l.b16 %v314
          %v455 = vpack.c.b16 %v392, %v391
          %v456 = vpack.c.b16 %v394, %v393
          %v457 = vpack.c.b16 %v396, %v395
          %v458 = vpack.c.b16 %v398, %v397
          %v459 = vpack.c.b16 %v400, %v399
          %v460 = vpack.c.b16 %v402, %v401
          %v461 = vpack.c.b16 %v404, %v403
          %v462 = vpack.c.b16 %v406, %v405
          %v463 = vpack.c.b16 %v408, %v407
          %v464 = vpack.c.b16 %v410, %v409
          %v465 = vpack.c.b16 %v412, %v411
          %v466 = vpack.c.b16 %v414, %v413
          %v467 = vpack.c.b16 %v416, %v415
          %v468 = vpack.c.b16 %v418, %v417
          %v469 = vpack.c.b16 %v420, %v419
          %v470 = vpack.c.b16 %v422, %v421
          %v471 = vpack.c.b16 %v424, %v423
          %v472 = vpack.c.b16 %v426, %v425
          %v473 = vpack.c.b16 %v428, %v427
          %v474 = vpack.c.b16 %v430, %v429
          %v475 = vpack.c.b16 %v432, %v431
          %v476 = vpack.c.b16 %v434, %v433
          %v477 = vpack.c.b16 %v436, %v435
          %v478 = vpack.c.b16 %v438, %v437
          %v479 = vpack.c.b16 %v440, %v439
          %v480 = vpack.c.b16 %v442, %v441
          %v481 = vpack.c.b16 %v444, %v443
          %v482 = vpack.c.b16 %v446, %v445
          %v483 = vpack.c.b16 %v448, %v447
          %v484 = vpack.c.b16 %v450, %v449
          %v485 = vpack.c.b16 %v452, %v451
          %v486 = vpack.c.b16 %v454, %v453
          %v492 = vunpack.c.l.b16 %v315
          %v493 = vunpack.c.l.b16 %v316
          %v494 = vunpack.c.l.b16 %v317
          %v495 = vunpack.c.l.b16 %v318
          %v496 = vunpack.c.l.b16 %v319
          %v497 = vpack.c.b16 %v493, %v492
          %v498 = vpack.c.b16 %v495, %v494
          %v499 = vpack.c.b16 %v496, %v496
          %vm502 = vcmask 293888
          %v504 = vsel %vm502, %v455, 0
          %v507 = vsel %vm502, %v456, 0
          %v510 = vsel %vm502, %v457, 0
          %v513 = vsel %vm502, %v458, 0
          %v516 = vsel %vm502, %v459, 0
          %v519 = vsel %vm502, %v460, 0
          %v522 = vsel %vm502, %v461, 0
          %v525 = vsel %vm502, %v462, 0
          %v528 = vsel %vm502, %v463, 0
          %v531 = vsel %vm502, %v464, 0
          %v534 = vsel %vm502, %v465, 0
          %v537 = vsel %vm502, %v466, 0
          %v540 = vsel %vm502, %v467, 0
          %v543 = vsel %vm502, %v468, 0
          %v546 = vsel %vm502, %v469, 0
          %v549 = vsel %vm502, %v470, 0
          %v552 = vsel %vm502, %v471, 0
          %v555 = vsel %vm502, %v472, 0
          %v558 = vsel %vm502, %v473, 0
          %v561 = vsel %vm502, %v474, 0
          %v564 = vsel %vm502, %v475, 0
          %v567 = vsel %vm502, %v476, 0
          %v570 = vsel %vm502, %v477, 0
          %v573 = vsel %vm502, %v478, 0
          %v576 = vsel %vm502, %v479, 0
          %v579 = vsel %vm502, %v480, 0
          %v582 = vsel %vm502, %v481, 0
          %v585 = vsel %vm502, %v482, 0
          %v588 = vsel %vm502, %v483, 0
          %v591 = vsel %vm502, %v484, 0
          %v594 = vsel %vm502, %v485, 0
          %v597 = vsel %vm502, %v486, 0
          %vm599 = vcmask 1041408
          %v601 = vsel %vm599, %v499, 0
          %603 = vmatprep.subr.bf16.mxu0 0
          %604 = vmatpush1.bf16.msra.mxu0 %v497
          %605 = vmatprep.subr.bf16.mxu0 0
          %606 = vmatpush1.bf16.msra.mxu0 %v498
          %607 = vmatprep.subr.bf16.mxu0 0
          %608 = vmatpush1.bf16.msra.mxu0 %v601
          %609 = vmatprep.subr.bf16.mxu0 0
          %610 = vmatpush1.bf16.msra.mxu0 0
          %611 = vmatprep.subr.bf16.mxu0 0
          %612 = vmatpush1.bf16.msra.mxu0 0
          %613 = vmatprep.subr.bf16.mxu0 0
          %614 = vmatpush1.bf16.msra.mxu0 0
          %615 = vmatprep.subr.bf16.mxu0 0
          %616 = vmatpush1.bf16.msra.mxu0 0
          %617 = vmatprep.subr.bf16.mxu0 0
          %618 = vmatpush1.bf16.msra.mxu0 0
          %619 = vmatprep.subr.bf16.mxu0 0
          %620 = vmatpush1.bf16.msra.mxu0 0
          %621 = vmatprep.subr.bf16.mxu0 0
          %622 = vmatpush1.bf16.msra.mxu0 0
          %623 = vmatprep.subr.bf16.mxu0 0
          %624 = vmatpush1.bf16.msra.mxu0 0
          %625 = vmatprep.subr.bf16.mxu0 0
          %626 = vmatpush1.bf16.msra.mxu0 0
          %627 = vmatprep.subr.bf16.mxu0 0
          %628 = vmatpush1.bf16.msra.mxu0 0
          %629 = vmatprep.subr.bf16.mxu0 0
          %630 = vmatpush1.bf16.msra.mxu0 0
          %631 = vmatprep.subr.bf16.mxu0 0
          %632 = vmatpush1.bf16.msra.mxu0 0
          %633 = vmatprep.subr.bf16.mxu0 0
          %634 = vmatpush1.bf16.msra.mxu0 0
          %635 = vmatprep.mubr.bf16.mxu0 0
          %636 = vmatmul.mubr.bf16.gmra.mrb[0].mxu0 %v504
          %v637 = vpop.f32.mrb[0].mxu0
          %v638 = vadd.f32 %v325, %v637
          %v639 = vpop.f32.mrb[0].mxu0
          %v640 = vpop.f32.mrb[0].mxu0
          %v641 = vadd.f32 %v325, %v640
          %v642 = vpop.f32.mrb[0].mxu0
          %643 = vmatprep.mubr.bf16.mxu0 0
          %644 = vmatmul.mubr.bf16.gmra.mrb[0].mxu0 %v507
          %v645 = vpop.f32.mrb[0].mxu0
          %v646 = vadd.f32 %v325, %v645
          %v647 = vpop.f32.mrb[0].mxu0
          %v648 = vpop.f32.mrb[0].mxu0
          %v649 = vadd.f32 %v325, %v648
          %v650 = vpop.f32.mrb[0].mxu0
          %651 = vmatprep.mubr.bf16.mxu0 0
          %652 = vmatmul.mubr.bf16.gmra.mrb[0].mxu0 %v510
          %v653 = vpop.f32.mrb[0].mxu0
          %v654 = vadd.f32 %v325, %v653
          %v655 = vpop.f32.mrb[0].mxu0
          %v656 = vpop.f32.mrb[0].mxu0
          %v657 = vadd.f32 %v325, %v656
          %v658 = vpop.f32.mrb[0].mxu0
          %659 = vmatprep.mubr.bf16.mxu0 0
          %660 = vmatmul.mubr.bf16.gmra.mrb[0].mxu0 %v513
          %v661 = vpop.f32.mrb[0].mxu0
          %v662 = vadd.f32 %v325, %v661
          %v663 = vpop.f32.mrb[0].mxu0
          %v664 = vpop.f32.mrb[0].mxu0
          %v665 = vadd.f32 %v325, %v664
          %v666 = vpop.f32.mrb[0].mxu0
          %667 = vmatprep.mubr.bf16.mxu0 0
          %668 = vmatmul.mubr.bf16.gmra.mrb[0].mxu0 %v516
          %v669 = vpop.f32.mrb[0].mxu0
          %v670 = vadd.f32 %v325, %v669
          %v671 = vpop.f32.mrb[0].mxu0
          %v672 = vpop.f32.mrb[0].mxu0
          %v673 = vadd.f32 %v325, %v672
          %v674 = vpop.f32.mrb[0].mxu0
          %675 = vmatprep.mubr.bf16.mxu0 0
          %676 = vmatmul.mubr.bf16.gmra.mrb[0].mxu0 %v519
          %v677 = vpop.f32.mrb[0].mxu0
          %v678 = vadd.f32 %v325, %v677
          %v679 = vpop.f32.mrb[0].mxu0
          %v680 = vpop.f32.mrb[0].mxu0
          %v681 = vadd.f32 %v325, %v680
          %v682 = vpop.f32.mrb[0].mxu0
          %683 = vmatprep.mubr.bf16.mxu0 0
          %684 = vmatmul.mubr.bf16.gmra.mrb[0].mxu0 %v522
          %v685 = vpop.f32.mrb[0].mxu0
          %v686 = vadd.f32 %v325, %v685
          %v687 = vpop.f32.mrb[0].mxu0
          %v688 = vpop.f32.mrb[0].mxu0
          %v689 = vadd.f32 %v325, %v688
          %v690 = vpop.f32.mrb[0].mxu0
          %691 = vmatprep.mubr.bf16.mxu0 0
          %692 = vmatmul.mubr.bf16.gmra.mrb[0].mxu0 %v525
          %v693 = vpop.f32.mrb[0].mxu0
          %v694 = vadd.f32 %v325, %v693
          %v695 = vpop.f32.mrb[0].mxu0
          %v696 = vpop.f32.mrb[0].mxu0
          %v697 = vadd.f32 %v325, %v696
          %v698 = vpop.f32.mrb[0].mxu0
          %699 = vmatprep.mubr.bf16.mxu0 0
          %700 = vmatmul.mubr.bf16.gmra.mrb[0].mxu0 %v528
          %v701 = vpop.f32.mrb[0].mxu0
          %v702 = vadd.f32 %v325, %v701
          %v703 = vpop.f32.mrb[0].mxu0
          %v704 = vpop.f32.mrb[0].mxu0
          %v705 = vadd.f32 %v325, %v704
          %v706 = vpop.f32.mrb[0].mxu0
          %707 = vmatprep.mubr.bf16.mxu0 0
          %708 = vmatmul.mubr.bf16.gmra.mrb[0].mxu0 %v531
          %v709 = vpop.f32.mrb[0].mxu0
          %v710 = vadd.f32 %v325, %v709
          %v711 = vpop.f32.mrb[0].mxu0
          %v712 = vpop.f32.mrb[0].mxu0
          %v713 = vadd.f32 %v325, %v712
          %v714 = vpop.f32.mrb[0].mxu0
          %715 = vmatprep.mubr.bf16.mxu0 0
          %716 = vmatmul.mubr.bf16.gmra.mrb[0].mxu0 %v534
          %v717 = vpop.f32.mrb[0].mxu0
          %v718 = vadd.f32 %v325, %v717
          %v719 = vpop.f32.mrb[0].mxu0
          %v720 = vpop.f32.mrb[0].mxu0
          %v721 = vadd.f32 %v325, %v720
          %v722 = vpop.f32.mrb[0].mxu0
          %723 = vmatprep.mubr.bf16.mxu0 0
          %724 = vmatmul.mubr.bf16.gmra.mrb[0].mxu0 %v537
          %v725 = vpop.f32.mrb[0].mxu0
          %v726 = vadd.f32 %v325, %v725
          %v727 = vpop.f32.mrb[0].mxu0
          %v728 = vpop.f32.mrb[0].mxu0
          %v729 = vadd.f32 %v325, %v728
          %v730 = vpop.f32.mrb[0].mxu0
          %731 = vmatprep.mubr.bf16.mxu0 0
          %732 = vmatmul.mubr.bf16.gmra.mrb[0].mxu0 %v540
          %v733 = vpop.f32.mrb[0].mxu0
          %v734 = vadd.f32 %v325, %v733
          %v735 = vpop.f32.mrb[0].mxu0
          %v736 = vpop.f32.mrb[0].mxu0
          %v737 = vadd.f32 %v325, %v736
          %v738 = vpop.f32.mrb[0].mxu0
          %739 = vmatprep.mubr.bf16.mxu0 0
          %740 = vmatmul.mubr.bf16.gmra.mrb[0].mxu0 %v543
          %v741 = vpop.f32.mrb[0].mxu0
          %v742 = vadd.f32 %v325, %v741
          %v743 = vpop.f32.mrb[0].mxu0
          %v744 = vpop.f32.mrb[0].mxu0
          %v745 = vadd.f32 %v325, %v744
          %v746 = vpop.f32.mrb[0].mxu0
          %747 = vmatprep.mubr.bf16.mxu0 0
          %748 = vmatmul.mubr.bf16.gmra.mrb[0].mxu0 %v546
          %v749 = vpop.f32.mrb[0].mxu0
          %v750 = vadd.f32 %v325, %v749
          %v751 = vpop.f32.mrb[0].mxu0
          %v752 = vpop.f32.mrb[0].mxu0
          %v753 = vadd.f32 %v325, %v752
          %v754 = vpop.f32.mrb[0].mxu0
          %755 = vmatprep.mubr.bf16.mxu0 0
          %756 = vmatmul.mubr.bf16.gmra.mrb[0].mxu0 %v549
          %v757 = vpop.f32.mrb[0].mxu0
          %v758 = vadd.f32 %v325, %v757
          %v759 = vpop.f32.mrb[0].mxu0
          %v760 = vpop.f32.mrb[0].mxu0
          %v761 = vadd.f32 %v325, %v760
          %v762 = vpop.f32.mrb[0].mxu0
          %763 = vmatprep.mubr.bf16.mxu0 0
          %764 = vmatmul.mubr.bf16.gmra.mrb[0].mxu0 %v552
          %v765 = vpop.f32.mrb[0].mxu0
          %v766 = vadd.f32 %v325, %v765
          %v767 = vpop.f32.mrb[0].mxu0
          %v768 = vpop.f32.mrb[0].mxu0
          %v769 = vadd.f32 %v325, %v768
          %v770 = vpop.f32.mrb[0].mxu0
          %771 = vmatprep.mubr.bf16.mxu0 0
          %772 = vmatmul.mubr.bf16.gmra.mrb[0].mxu0 %v555
          %v773 = vpop.f32.mrb[0].mxu0
          %v774 = vadd.f32 %v325, %v773
          %v775 = vpop.f32.mrb[0].mxu0
          %v776 = vpop.f32.mrb[0].mxu0
          %v777 = vadd.f32 %v325, %v776
          %v778 = vpop.f32.mrb[0].mxu0
          %779 = vmatprep.mubr.bf16.mxu0 0
          %780 = vmatmul.mubr.bf16.gmra.mrb[0].mxu0 %v558
          %v781 = vpop.f32.mrb[0].mxu0
          %v782 = vadd.f32 %v325, %v781
          %v783 = vpop.f32.mrb[0].mxu0
          %v784 = vpop.f32.mrb[0].mxu0
          %v785 = vadd.f32 %v325, %v784
          %v786 = vpop.f32.mrb[0].mxu0
          %787 = vmatprep.mubr.bf16.mxu0 0
          %788 = vmatmul.mubr.bf16.gmra.mrb[0].mxu0 %v561
          %v789 = vpop.f32.mrb[0].mxu0
          %v790 = vadd.f32 %v325, %v789
          %v791 = vpop.f32.mrb[0].mxu0
          %v792 = vpop.f32.mrb[0].mxu0
          %v793 = vadd.f32 %v325, %v792
          %v794 = vpop.f32.mrb[0].mxu0
          %795 = vmatprep.mubr.bf16.mxu0 0
          %796 = vmatmul.mubr.bf16.gmra.mrb[0].mxu0 %v564
          %v797 = vpop.f32.mrb[0].mxu0
          %v798 = vadd.f32 %v325, %v797
          %v799 = vpop.f32.mrb[0].mxu0
          %v800 = vpop.f32.mrb[0].mxu0
          %v801 = vadd.f32 %v325, %v800
          %v802 = vpop.f32.mrb[0].mxu0
          %803 = vmatprep.mubr.bf16.mxu0 0
          %804 = vmatmul.mubr.bf16.gmra.mrb[0].mxu0 %v567
          %v805 = vpop.f32.mrb[0].mxu0
          %v806 = vadd.f32 %v325, %v805
          %v807 = vpop.f32.mrb[0].mxu0
          %v808 = vpop.f32.mrb[0].mxu0
          %v809 = vadd.f32 %v325, %v808
          %v810 = vpop.f32.mrb[0].mxu0
          %811 = vmatprep.mubr.bf16.mxu0 0
          %812 = vmatmul.mubr.bf16.gmra.mrb[0].mxu0 %v570
          %v813 = vpop.f32.mrb[0].mxu0
          %v814 = vadd.f32 %v325, %v813
          %v815 = vpop.f32.mrb[0].mxu0
          %v816 = vpop.f32.mrb[0].mxu0
          %v817 = vadd.f32 %v325, %v816
          %v818 = vpop.f32.mrb[0].mxu0
          %819 = vmatprep.mubr.bf16.mxu0 0
          %820 = vmatmul.mubr.bf16.gmra.mrb[0].mxu0 %v573
          %v821 = vpop.f32.mrb[0].mxu0
          %v822 = vadd.f32 %v325, %v821
          %v823 = vpop.f32.mrb[0].mxu0
          %v824 = vpop.f32.mrb[0].mxu0
          %v825 = vadd.f32 %v325, %v824
          %v826 = vpop.f32.mrb[0].mxu0
          %827 = vmatprep.mubr.bf16.mxu0 0
          %828 = vmatmul.mubr.bf16.gmra.mrb[0].mxu0 %v576
          %v829 = vpop.f32.mrb[0].mxu0
          %v830 = vadd.f32 %v325, %v829
          %v831 = vpop.f32.mrb[0].mxu0
          %v832 = vpop.f32.mrb[0].mxu0
          %v833 = vadd.f32 %v325, %v832
          %v834 = vpop.f32.mrb[0].mxu0
          %835 = vmatprep.mubr.bf16.mxu0 0
          %836 = vmatmul.mubr.bf16.gmra.mrb[0].mxu0 %v579
          %v837 = vpop.f32.mrb[0].mxu0
          %v838 = vadd.f32 %v325, %v837
          %v839 = vpop.f32.mrb[0].mxu0
          %v840 = vpop.f32.mrb[0].mxu0
          %v841 = vadd.f32 %v325, %v840
          %v842 = vpop.f32.mrb[0].mxu0
          %843 = vmatprep.mubr.bf16.mxu0 0
          %844 = vmatmul.mubr.bf16.gmra.mrb[0].mxu0 %v582
          %v845 = vpop.f32.mrb[0].mxu0
          %v846 = vadd.f32 %v325, %v845
          %v847 = vpop.f32.mrb[0].mxu0
          %v848 = vpop.f32.mrb[0].mxu0
          %v849 = vadd.f32 %v325, %v848
          %v850 = vpop.f32.mrb[0].mxu0
          %851 = vmatprep.mubr.bf16.mxu0 0
          %852 = vmatmul.mubr.bf16.gmra.mrb[0].mxu0 %v585
          %v853 = vpop.f32.mrb[0].mxu0
          %v854 = vadd.f32 %v325, %v853
          %v855 = vpop.f32.mrb[0].mxu0
          %v856 = vpop.f32.mrb[0].mxu0
          %v857 = vadd.f32 %v325, %v856
          %v858 = vpop.f32.mrb[0].mxu0
          %859 = vmatprep.mubr.bf16.mxu0 0
          %860 = vmatmul.mubr.bf16.gmra.mrb[0].mxu0 %v588
          %v861 = vpop.f32.mrb[0].mxu0
          %v862 = vadd.f32 %v325, %v861
          %v863 = vpop.f32.mrb[0].mxu0
          %v864 = vpop.f32.mrb[0].mxu0
          %v865 = vadd.f32 %v325, %v864
          %v866 = vpop.f32.mrb[0].mxu0
          %867 = vmatprep.mubr.bf16.mxu0 0
          %868 = vmatmul.mubr.bf16.gmra.mrb[0].mxu0 %v591
          %v869 = vpop.f32.mrb[0].mxu0
          %v870 = vadd.f32 %v325, %v869
          %v871 = vpop.f32.mrb[0].mxu0
          %v872 = vpop.f32.mrb[0].mxu0
          %v873 = vadd.f32 %v325, %v872
          %v874 = vpop.f32.mrb[0].mxu0
          %875 = vmatprep.mubr.bf16.mxu0 0
          %876 = vmatmul.mubr.bf16.gmra.mrb[0].mxu0 %v594
          %v877 = vpop.f32.mrb[0].mxu0
          %v878 = vadd.f32 %v325, %v877
          %v879 = vpop.f32.mrb[0].mxu0
          %v880 = vpop.f32.mrb[0].mxu0
          %v881 = vadd.f32 %v325, %v880
          %v882 = vpop.f32.mrb[0].mxu0
          %883 = vmatprep.mubr.bf16.mxu0 0
          %884 = vmatmul.mubr.bf16.gmra.mrb[0].mxu0 %v597
          %v885 = vpop.f32.mrb[0].mxu0
          %v886 = vadd.f32 %v325, %v885
          %v887 = vpop.f32.mrb[0].mxu0
          %v888 = vpop.f32.mrb[0].mxu0
          %v889 = vadd.f32 %v325, %v888
          %v890 = vpop.f32.mrb[0].mxu0
          %891 = vdwg.mxu0
          %v892 = vld [vmem:[#allocation2] sm:$0x1]
          %v893 = vadd.f32 %v638, %v641
          %v894 = vadd.f32 %v893, %v646
          %v895 = vadd.f32 %v894, %v649
          %v896 = vadd.f32 %v895, %v654
          %v897 = vadd.f32 %v896, %v657
          %v898 = vadd.f32 %v897, %v662
          %v899 = vadd.f32 %v898, %v665
          %v900 = vadd.f32 %v899, %v670
          %v901 = vadd.f32 %v900, %v673
          %v902 = vadd.f32 %v901, %v678
          %v903 = vadd.f32 %v902, %v681
          %v904 = vadd.f32 %v903, %v686
          %v905 = vadd.f32 %v904, %v689
          %v906 = vadd.f32 %v905, %v694
          %v907 = vadd.f32 %v906, %v697
          %v908 = vadd.f32 %v907, %v702
          %v909 = vadd.f32 %v908, %v705
          %v910 = vadd.f32 %v909, %v710
          %v911 = vadd.f32 %v910, %v713
          %v912 = vadd.f32 %v911, %v718
          %v913 = vadd.f32 %v912, %v721
          %v914 = vadd.f32 %v913, %v726
          %v915 = vadd.f32 %v914, %v729
          %v916 = vadd.f32 %v915, %v734
          %v917 = vadd.f32 %v916, %v737
          %v918 = vadd.f32 %v917, %v742
          %v919 = vadd.f32 %v918, %v745
          %v920 = vadd.f32 %v919, %v750
          %v921 = vadd.f32 %v920, %v753
          %v922 = vadd.f32 %v921, %v758
          %v923 = vadd.f32 %v922, %v761
          %v924 = vadd.f32 %v923, %v766
          %v925 = vadd.f32 %v924, %v769
          %v926 = vadd.f32 %v925, %v774
          %v927 = vadd.f32 %v926, %v777
          %v928 = vadd.f32 %v927, %v782
          %v929 = vadd.f32 %v928, %v785
          %v930 = vadd.f32 %v929, %v790
          %v931 = vadd.f32 %v930, %v793
          %v932 = vadd.f32 %v931, %v798
          %v933 = vadd.f32 %v932, %v801
          %v934 = vadd.f32 %v933, %v806
          %v935 = vadd.f32 %v934, %v809
          %v936 = vadd.f32 %v935, %v814
          %v937 = vadd.f32 %v936, %v817
          %v938 = vadd.f32 %v937, %v822
          %v939 = vadd.f32 %v938, %v825
          %v940 = vadd.f32 %v939, %v830
          %v941 = vadd.f32 %v940, %v833
          %v942 = vadd.f32 %v941, %v838
          %v943 = vadd.f32 %v942, %v841
          %v944 = vadd.f32 %v943, %v846
          %v945 = vadd.f32 %v944, %v849
          %v946 = vadd.f32 %v945, %v854
          %v947 = vadd.f32 %v946, %v857
          %v948 = vadd.f32 %v947, %v862
          %v949 = vadd.f32 %v948, %v865
          %v950 = vadd.f32 %v949, %v870
          %v951 = vadd.f32 %v950, %v873
          %v952 = vadd.f32 %v951, %v878
          %v953 = vadd.f32 %v952, %v881
          %v954 = vadd.f32 %v953, %v886
          %v955 = vadd.f32 %v954, %v889
          %v956 = vrot.slane %v955, 4
          %v957 = vadd.f32 %v955, %v956
          %v958 = vrot.slane %v957, 2
          %v959 = vadd.f32 %v957, %v958
          %v960 = vrot.slane %v959, 1
          %v961 = vadd.f32 %v959, %v960
          %v962 = vadd.f32 %v892, %v961
          %963 = vst [vmem:[#allocation2] sm:$0x1] %v962
          %v964 = vld [vmem:[#allocation2 + $0x1] sm:$0x1]
          %v965 = vmul.f32 %v638, %v638
          %v966 = vmul.f32 %v641, %v641
          %v967 = vmul.f32 %v646, %v646
          %v968 = vmul.f32 %v649, %v649
          %v969 = vmul.f32 %v654, %v654
          %v970 = vmul.f32 %v657, %v657
          %v971 = vmul.f32 %v662, %v662
          %v972 = vmul.f32 %v665, %v665
          %v973 = vmul.f32 %v670, %v670
          %v974 = vmul.f32 %v673, %v673
          %v975 = vmul.f32 %v678, %v678
          %v976 = vmul.f32 %v681, %v681
          %v977 = vmul.f32 %v686, %v686
          %v978 = vmul.f32 %v689, %v689
          %v979 = vmul.f32 %v694, %v694
          %v980 = vmul.f32 %v697, %v697
          %v981 = vmul.f32 %v702, %v702
          %v982 = vmul.f32 %v705, %v705
          %v983 = vmul.f32 %v710, %v710
          %v984 = vmul.f32 %v713, %v713
          %v985 = vmul.f32 %v718, %v718
          %v986 = vmul.f32 %v721, %v721
          %v987 = vmul.f32 %v726, %v726
          %v988 = vmul.f32 %v729, %v729
          %v989 = vmul.f32 %v734, %v734
          %v990 = vmul.f32 %v737, %v737
          %v991 = vmul.f32 %v742, %v742
          %v992 = vmul.f32 %v745, %v745
          %v993 = vmul.f32 %v750, %v750
          %v994 = vmul.f32 %v753, %v753
          %v995 = vmul.f32 %v758, %v758
          %v996 = vmul.f32 %v761, %v761
          %v997 = vmul.f32 %v766, %v766
          %v998 = vmul.f32 %v769, %v769
          %v999 = vmul.f32 %v774, %v774
          %v1000 = vmul.f32 %v777, %v777
          %v1001 = vmul.f32 %v782, %v782
          %v1002 = vmul.f32 %v785, %v785
          %v1003 = vmul.f32 %v790, %v790
          %v1004 = vmul.f32 %v793, %v793
          %v1005 = vmul.f32 %v798, %v798
          %v1006 = vmul.f32 %v801, %v801
          %v1007 = vmul.f32 %v806, %v806
          %v1008 = vmul.f32 %v809, %v809
          %v1009 = vmul.f32 %v814, %v814
          %v1010 = vmul.f32 %v817, %v817
          %v1011 = vmul.f32 %v822, %v822
          %v1012 = vmul.f32 %v825, %v825
          %v1013 = vmul.f32 %v830, %v830
          %v1014 = vmul.f32 %v833, %v833
          %v1015 = vmul.f32 %v838, %v838
          %v1016 = vmul.f32 %v841, %v841
          %v1017 = vmul.f32 %v846, %v846
          %v1018 = vmul.f32 %v849, %v849
          %v1019 = vmul.f32 %v854, %v854
          %v1020 = vmul.f32 %v857, %v857
          %v1021 = vmul.f32 %v862, %v862
          %v1022 = vmul.f32 %v865, %v865
          %v1023 = vmul.f32 %v870, %v870
          %v1024 = vmul.f32 %v873, %v873
          %v1025 = vmul.f32 %v878, %v878
          %v1026 = vmul.f32 %v881, %v881
          %v1027 = vmul.f32 %v886, %v886
          %v1028 = vmul.f32 %v889, %v889
          %v1029 = vadd.f32 %v965, %v966
          %v1030 = vadd.f32 %v1029, %v967
          %v1031 = vadd.f32 %v1030, %v968
          %v1032 = vadd.f32 %v1031, %v969
          %v1033 = vadd.f32 %v1032, %v970
          %v1034 = vadd.f32 %v1033, %v971
          %v1035 = vadd.f32 %v1034, %v972
          %v1036 = vadd.f32 %v1035, %v973
          %v1037 = vadd.f32 %v1036, %v974
          %v1038 = vadd.f32 %v1037, %v975
          %v1039 = vadd.f32 %v1038, %v976
          %v1040 = vadd.f32 %v1039, %v977
          %v1041 = vadd.f32 %v1040, %v978
          %v1042 = vadd.f32 %v1041, %v979
          %v1043 = vadd.f32 %v1042, %v980
          %v1044 = vadd.f32 %v1043, %v981
          %v1045 = vadd.f32 %v1044, %v982
          %v1046 = vadd.f32 %v1045, %v983
          %v1047 = vadd.f32 %v1046, %v984
          %v1048 = vadd.f32 %v1047, %v985
          %v1049 = vadd.f32 %v1048, %v986
          %v1050 = vadd.f32 %v1049, %v987
          %v1051 = vadd.f32 %v1050, %v988
          %v1052 = vadd.f32 %v1051, %v989
          %v1053 = vadd.f32 %v1052, %v990
          %v1054 = vadd.f32 %v1053, %v991
          %v1055 = vadd.f32 %v1054, %v992
          %v1056 = vadd.f32 %v1055, %v993
          %v1057 = vadd.f32 %v1056, %v994
          %v1058 = vadd.f32 %v1057, %v995
          %v1059 = vadd.f32 %v1058, %v996
          %v1060 = vadd.f32 %v1059, %v997
          %v1061 = vadd.f32 %v1060, %v998
          %v1062 = vadd.f32 %v1061, %v999
          %v1063 = vadd.f32 %v1062, %v1000
          %v1064 = vadd.f32 %v1063, %v1001
          %v1065 = vadd.f32 %v1064, %v1002
          %v1066 = vadd.f32 %v1065, %v1003
          %v1067 = vadd.f32 %v1066, %v1004
          %v1068 = vadd.f32 %v1067, %v1005
          %v1069 = vadd.f32 %v1068, %v1006
          %v1070 = vadd.f32 %v1069, %v1007
          %v1071 = vadd.f32 %v1070, %v1008
          %v1072 = vadd.f32 %v1071, %v1009
          %v1073 = vadd.f32 %v1072, %v1010
          %v1074 = vadd.f32 %v1073, %v1011
          %v1075 = vadd.f32 %v1074, %v1012
          %v1076 = vadd.f32 %v1075, %v1013
          %v1077 = vadd.f32 %v1076, %v1014
          %v1078 = vadd.f32 %v1077, %v1015
          %v1079 = vadd.f32 %v1078, %v1016
          %v1080 = vadd.f32 %v1079, %v1017
          %v1081 = vadd.f32 %v1080, %v1018
          %v1082 = vadd.f32 %v1081, %v1019
          %v1083 = vadd.f32 %v1082, %v1020
          %v1084 = vadd.f32 %v1083, %v1021
          %v1085 = vadd.f32 %v1084, %v1022
          %v1086 = vadd.f32 %v1085, %v1023
          %v1087 = vadd.f32 %v1086, %v1024
          %v1088 = vadd.f32 %v1087, %v1025
          %v1089 = vadd.f32 %v1088, %v1026
          %v1090 = vadd.f32 %v1089, %v1027
          %v1091 = vadd.f32 %v1090, %v1028
          %v1092 = vrot.slane %v1091, 4
          %v1093 = vadd.f32 %v1091, %v1092
          %v1094 = vrot.slane %v1093, 2
          %v1095 = vadd.f32 %v1093, %v1094
          %v1096 = vrot.slane %v1095, 1
          %v1097 = vadd.f32 %v1095, %v1096
          %v1098 = vadd.f32 %v964, %v1097
          %1099 = vst [vmem:[#allocation2 + $0x1] sm:$0x1] %v1098
        $region44: #{tpu_custom_call.1} parent=39 // pred_fallthru
          _
        %p1100 = scmp.eq.s32.totalorder %s23, 1
        // Predicated region
        $region49: #{tpu_custom_call.1} parent=39 // pred_check
          %p1101 = pneg %p1100
        $region50: #{tpu_custom_call.1} parent=39 // pred_check_branch
          %1103 = sbr.rel (%p1101) target = $region52
        $region51: #{tpu_custom_call.1} parent=39 // pred_region
          %p1104 = scmp.eq.s32.totalorder %s24, 0
          // Predicated region
          $region53: #{tpu_custom_call.1} parent=51 // pred_check
            %p1105 = pneg %p1104
          $region54: #{tpu_custom_call.1} parent=51 // pred_check_branch
            %1107 = sbr.rel (%p1105) target = $region56
          $region55: #{tpu_custom_call.1} parent=51 // pred_region
            %v1108 = vld [vmem:[#allocation2] sm:$0x1]
            %v1109 = vmul.f32 %v1108, 0.001953125
            %v1110 = vld [vmem:[#allocation2 + $0x1] sm:$0x1]
            %v1111 = vmul.f32 %v1110, 0.001953125
            %v1112 = vmul.f32 %v1109, %v1109
            %v1113 = vsub.f32 %v1111, %v1112
            %v1114 = vmax.f32 %v1113, 0.0
            %v1115 = vld [vmem:[%s3] sm:$0x1]
            %v1116 = vadd.f32 %v1114, 1e-05
            %v1117 = vrsqrt.pop %v1116
            %v1118 = vmul.f32 %v1115, %v1117
            %1119 = vst [vmem:[#allocation3] sm:$0x1] %v1118
            %v1120 = vld [vmem:[%s4] sm:$0x1]
            %v1121 = vmul.f32 %v1109, %v1118
            %v1122 = vsub.f32 %v1120, %v1121
            %1123 = vst [vmem:[#allocation3 + $0x1] sm:$0x1] %v1122
          $region56: #{tpu_custom_call.1} parent=51 // pred_fallthru
            _
          %v1124 = vld [vmem:[%s237] sm:$0xf]
          %v1125 = vld [vmem:[%s237 + $0x4] sm:$0xf]
          %v1126 = vld [vmem:[%s237 + $0x8] sm:$0xf]
          %v1127 = vld [vmem:[%s237 + $0xc] sm:$0xf]
          %v1128 = vld [vmem:[%s237 + $0x10] sm:$0xf]
          %v1129 = vld [vmem:[%s237 + $0x14] sm:$0xf]
          %v1130 = vld [vmem:[%s237 + $0x18] sm:$0xf]
          %v1131 = vld [vmem:[%s237 + $0x1c] sm:$0xf]
          %v1132 = vld [vmem:[%s237 + $0x20] sm:$0xf]
          %v1133 = vld [vmem:[%s237 + $0x24] sm:$0xf]
          %v1134 = vld [vmem:[%s237 + $0x28] sm:$0xf]
          %v1135 = vld [vmem:[%s237 + $0x2c] sm:$0xf]
          %v1136 = vld [vmem:[%s237 + $0x30] sm:$0xf]
          %v1137 = vld [vmem:[%s237 + $0x34] sm:$0xf]
          %v1138 = vld [vmem:[%s237 + $0x38] sm:$0xf]
          %v1139 = vld [vmem:[%s237 + $0x3c] sm:$0xf]
          %v1140 = vld [vmem:[%s237 + $0x40] sm:$0xf]
          %v1141 = vld [vmem:[%s237 + $0x44] sm:$0xf]
          %v1142 = vld [vmem:[%s237 + $0x48] sm:$0xf]
          %v1143 = vld [vmem:[%s237 + $0x4c] sm:$0xf]
          %v1144 = vld [vmem:[%s237 + $0x50] sm:$0xf]
          %v1145 = vld [vmem:[%s237 + $0x54] sm:$0xf]
          %v1146 = vld [vmem:[%s237 + $0x58] sm:$0xf]
          %v1147 = vld [vmem:[%s237 + $0x5c] sm:$0xf]
          %v1148 = vld [vmem:[%s237 + $0x60] sm:$0xf]
          %v1149 = vld [vmem:[%s237 + $0x64] sm:$0xf]
          %v1150 = vld [vmem:[%s237 + $0x68] sm:$0xf]
          %v1151 = vld [vmem:[%s237 + $0x6c] sm:$0xf]
          %v1152 = vld [vmem:[%s237 + $0x70] sm:$0xf]
          %v1153 = vld [vmem:[%s237 + $0x74] sm:$0xf]
          %v1154 = vld [vmem:[%s237 + $0x78] sm:$0xf]
          %v1155 = vld [vmem:[%s237 + $0x7c] sm:$0xf]
          %v1156 = vld [vmem:[%s237 + $0x80] sm:$0xf]
          %v1157 = vld [vmem:[%s237 + $0x84] sm:$0xf]
          %v1158 = vld [vmem:[%s237 + $0x88] sm:$0xf]
          %v1159 = vld [vmem:[%s237 + $0x8c] sm:$0xf]
          %v1160 = vld [vmem:[%s237 + $0x90] sm:$0xf]
          %v1161 = vld [vmem:[%s237 + $0x94] sm:$0xf]
          %v1162 = vld [vmem:[%s237 + $0x98] sm:$0xf]
          %v1163 = vld [vmem:[%s237 + $0x9c] sm:$0xf]
          %v1164 = vld [vmem:[%s237 + $0xa0] sm:$0xf]
          %v1165 = vld [vmem:[%s237 + $0xa4] sm:$0xf]
          %v1166 = vld [vmem:[%s237 + $0xa8] sm:$0xf]
          %v1167 = vld [vmem:[%s237 + $0xac] sm:$0xf]
          %v1168 = vld [vmem:[%s237 + $0xb0] sm:$0xf]
          %v1169 = vld [vmem:[%s237 + $0xb4] sm:$0xf]
          %v1170 = vld [vmem:[%s237 + $0xb8] sm:$0xf]
          %v1171 = vld [vmem:[%s237 + $0xbc] sm:$0xf]
          %v1172 = vld [vmem:[%s237 + $0xc0] sm:$0xf]
          %v1173 = vld [vmem:[%s237 + $0xc4] sm:$0xf]
          %v1174 = vld [vmem:[%s237 + $0xc8] sm:$0xf]
          %v1175 = vld [vmem:[%s237 + $0xcc] sm:$0xf]
          %v1176 = vld [vmem:[%s237 + $0xd0] sm:$0xf]
          %v1177 = vld [vmem:[%s237 + $0xd4] sm:$0xf]
          %v1178 = vld [vmem:[%s237 + $0xd8] sm:$0xf]
          %v1179 = vld [vmem:[%s237 + $0xdc] sm:$0xf]
          %v1180 = vld [vmem:[%s237 + $0xe0] sm:$0xf]
          %v1181 = vld [vmem:[%s237 + $0xe4] sm:$0xf]
          %v1182 = vld [vmem:[%s237 + $0xe8] sm:$0xf]
          %v1183 = vld [vmem:[%s237 + $0xec] sm:$0xf]
          %v1184 = vld [vmem:[%s237 + $0xf0] sm:$0xf]
          %v1185 = vld [vmem:[%s237 + $0xf4] sm:$0xf]
          %v1186 = vld [vmem:[%s237 + $0xf8] sm:$0xf]
          %v1187 = vld [vmem:[%s237 + $0xfc] sm:$0xf]
          %v1188 = vld [vmem:[%s1] sm:$0xf]
          %v1189 = vld [vmem:[%s1 + $0x4] sm:$0xf]
          %v1190 = vld [vmem:[%s1 + $0x8] sm:$0xf]
          %v1191 = vld [vmem:[%s1 + $0xc] sm:$0xf]
          %v1192 = vld [vmem:[%s1 + $0x10] sm:$0x3]
          %v1193 = vld [vmem:[%s2] sm:$0x1]
          %v1195 = vlaneseq
          %v1196 = vshrl.u32 %v1195, 7
          %v1197 = vsub.s32 0, %v1196
          %v1198 = vrot.slane %v1193, %v1197
          %v1264 = vunpack.c.l.b16 %v1124
          %v1265 = vunpack.c.l.b16 %v1125
          %v1266 = vunpack.c.l.b16 %v1126
          %v1267 = vunpack.c.l.b16 %v1127
          %v1268 = vunpack.c.l.b16 %v1128
          %v1269 = vunpack.c.l.b16 %v1129
          %v1270 = vunpack.c.l.b16 %v1130
          %v1271 = vunpack.c.l.b16 %v1131
          %v1272 = vunpack.c.l.b16 %v1132
          %v1273 = vunpack.c.l.b16 %v1133
          %v1274 = vunpack.c.l.b16 %v1134
          %v1275 = vunpack.c.l.b16 %v1135
          %v1276 = vunpack.c.l.b16 %v1136
          %v1277 = vunpack.c.l.b16 %v1137
          %v1278 = vunpack.c.l.b16 %v1138
          %v1279 = vunpack.c.l.b16 %v1139
          %v1280 = vunpack.c.l.b16 %v1140
          %v1281 = vunpack.c.l.b16 %v1141
          %v1282 = vunpack.c.l.b16 %v1142
          %v1283 = vunpack.c.l.b16 %v1143
          %v1284 = vunpack.c.l.b16 %v1144
          %v1285 = vunpack.c.l.b16 %v1145
          %v1286 = vunpack.c.l.b16 %v1146
          %v1287 = vunpack.c.l.b16 %v1147
          %v1288 = vunpack.c.l.b16 %v1148
          %v1289 = vunpack.c.l.b16 %v1149
          %v1290 = vunpack.c.l.b16 %v1150
          %v1291 = vunpack.c.l.b16 %v1151
          %v1292 = vunpack.c.l.b16 %v1152
          %v1293 = vunpack.c.l.b16 %v1153
          %v1294 = vunpack.c.l.b16 %v1154
          %v1295 = vunpack.c.l.b16 %v1155
          %v1296 = vunpack.c.l.b16 %v1156
          %v1297 = vunpack.c.l.b16 %v1157
          %v1298 = vunpack.c.l.b16 %v1158
          %v1299 = vunpack.c.l.b16 %v1159
          %v1300 = vunpack.c.l.b16 %v1160
          %v1301 = vunpack.c.l.b16 %v1161
          %v1302 = vunpack.c.l.b16 %v1162
          %v1303 = vunpack.c.l.b16 %v1163
          %v1304 = vunpack.c.l.b16 %v1164
          %v1305 = vunpack.c.l.b16 %v1165
          %v1306 = vunpack.c.l.b16 %v1166
          %v1307 = vunpack.c.l.b16 %v1167
          %v1308 = vunpack.c.l.b16 %v1168
          %v1309 = vunpack.c.l.b16 %v1169
          %v1310 = vunpack.c.l.b16 %v1170
          %v1311 = vunpack.c.l.b16 %v1171
          %v1312 = vunpack.c.l.b16 %v1172
          %v1313 = vunpack.c.l.b16 %v1173
          %v1314 = vunpack.c.l.b16 %v1174
          %v1315 = vunpack.c.l.b16 %v1175
          %v1316 = vunpack.c.l.b16 %v1176
          %v1317 = vunpack.c.l.b16 %v1177
          %v1318 = vunpack.c.l.b16 %v1178
          %v1319 = vunpack.c.l.b16 %v1179
          %v1320 = vunpack.c.l.b16 %v1180
          %v1321 = vunpack.c.l.b16 %v1181
          %v1322 = vunpack.c.l.b16 %v1182
          %v1323 = vunpack.c.l.b16 %v1183
          %v1324 = vunpack.c.l.b16 %v1184
          %v1325 = vunpack.c.l.b16 %v1185
          %v1326 = vunpack.c.l.b16 %v1186
          %v1327 = vunpack.c.l.b16 %v1187
          %v1328 = vpack.c.b16 %v1265, %v1264
          %v1329 = vpack.c.b16 %v1267, %v1266
          %v1330 = vpack.c.b16 %v1269, %v1268
          %v1331 = vpack.c.b16 %v1271, %v1270
          %v1332 = vpack.c.b16 %v1273, %v1272
          %v1333 = vpack.c.b16 %v1275, %v1274
          %v1334 = vpack.c.b16 %v1277, %v1276
          %v1335 = vpack.c.b16 %v1279, %v1278
          %v1336 = vpack.c.b16 %v1281, %v1280
          %v1337 = vpack.c.b16 %v1283, %v1282
          %v1338 = vpack.c.b16 %v1285, %v1284
          %v1339 = vpack.c.b16 %v1287, %v1286
          %v1340 = vpack.c.b16 %v1289, %v1288
          %v1341 = vpack.c.b16 %v1291, %v1290
          %v1342 = vpack.c.b16 %v1293, %v1292
          %v1343 = vpack.c.b16 %v1295, %v1294
          %v1344 = vpack.c.b16 %v1297, %v1296
          %v1345 = vpack.c.b16 %v1299, %v1298
          %v1346 = vpack.c.b16 %v1301, %v1300
          %v1347 = vpack.c.b16 %v1303, %v1302
          %v1348 = vpack.c.b16 %v1305, %v1304
          %v1349 = vpack.c.b16 %v1307, %v1306
          %v1350 = vpack.c.b16 %v1309, %v1308
          %v1351 = vpack.c.b16 %v1311, %v1310
          %v1352 = vpack.c.b16 %v1313, %v1312
          %v1353 = vpack.c.b16 %v1315, %v1314
          %v1354 = vpack.c.b16 %v1317, %v1316
          %v1355 = vpack.c.b16 %v1319, %v1318
          %v1356 = vpack.c.b16 %v1321, %v1320
          %v1357 = vpack.c.b16 %v1323, %v1322
          %v1358 = vpack.c.b16 %v1325, %v1324
          %v1359 = vpack.c.b16 %v1327, %v1326
          %v1365 = vunpack.c.l.b16 %v1188
          %v1366 = vunpack.c.l.b16 %v1189
          %v1367 = vunpack.c.l.b16 %v1190
          %v1368 = vunpack.c.l.b16 %v1191
          %v1369 = vunpack.c.l.b16 %v1192
          %v1370 = vpack.c.b16 %v1366, %v1365
          %v1371 = vpack.c.b16 %v1368, %v1367
          %v1372 = vpack.c.b16 %v1369, %v1369
          %vm1375 = vcmask 293888
          %v1377 = vsel %vm1375, %v1328, 0
          %v1380 = vsel %vm1375, %v1329, 0
          %v1383 = vsel %vm1375, %v1330, 0
          %v1386 = vsel %vm1375, %v1331, 0
          %v1389 = vsel %vm1375, %v1332, 0
          %v1392 = vsel %vm1375, %v1333, 0
          %v1395 = vsel %vm1375, %v1334, 0
          %v1398 = vsel %vm1375, %v1335, 0
          %v1401 = vsel %vm1375, %v1336, 0
          %v1404 = vsel %vm1375, %v1337, 0
          %v1407 = vsel %vm1375, %v1338, 0
          %v1410 = vsel %vm1375, %v1339, 0
          %v1413 = vsel %vm1375, %v1340, 0
          %v1416 = vsel %vm1375, %v1341, 0
          %v1419 = vsel %vm1375, %v1342, 0
          %v1422 = vsel %vm1375, %v1343, 0
          %v1425 = vsel %vm1375, %v1344, 0
          %v1428 = vsel %vm1375, %v1345, 0
          %v1431 = vsel %vm1375, %v1346, 0
          %v1434 = vsel %vm1375, %v1347, 0
          %v1437 = vsel %vm1375, %v1348, 0
          %v1440 = vsel %vm1375, %v1349, 0
          %v1443 = vsel %vm1375, %v1350, 0
          %v1446 = vsel %vm1375, %v1351, 0
          %v1449 = vsel %vm1375, %v1352, 0
          %v1452 = vsel %vm1375, %v1353, 0
          %v1455 = vsel %vm1375, %v1354, 0
          %v1458 = vsel %vm1375, %v1355, 0
          %v1461 = vsel %vm1375, %v1356, 0
          %v1464 = vsel %vm1375, %v1357, 0
          %v1467 = vsel %vm1375, %v1358, 0
          %v1470 = vsel %vm1375, %v1359, 0
          %vm1472 = vcmask 1041408
          %v1474 = vsel %vm1472, %v1372, 0
          %1476 = vmatprep.subr.bf16.mxu0 0
          %1477 = vmatpush1.bf16.msra.mxu0 %v1370
          %1478 = vmatprep.subr.bf16.mxu0 0
          %1479 = vmatpush1.bf16.msra.mxu0 %v1371
          %1480 = vmatprep.subr.bf16.mxu0 0
          %1481 = vmatpush1.bf16.msra.mxu0 %v1474
          %1482 = vmatprep.subr.bf16.mxu0 0
          %1483 = vmatpush1.bf16.msra.mxu0 0
          %1484 = vmatprep.subr.bf16.mxu0 0
          %1485 = vmatpush1.bf16.msra.mxu0 0
          %1486 = vmatprep.subr.bf16.mxu0 0
          %1487 = vmatpush1.bf16.msra.mxu0 0
          %1488 = vmatprep.subr.bf16.mxu0 0
          %1489 = vmatpush1.bf16.msra.mxu0 0
          %1490 = vmatprep.subr.bf16.mxu0 0
          %1491 = vmatpush1.bf16.msra.mxu0 0
          %1492 = vmatprep.subr.bf16.mxu0 0
          %1493 = vmatpush1.bf16.msra.mxu0 0
          %1494 = vmatprep.subr.bf16.mxu0 0
          %1495 = vmatpush1.bf16.msra.mxu0 0
          %1496 = vmatprep.subr.bf16.mxu0 0
          %1497 = vmatpush1.bf16.msra.mxu0 0
          %1498 = vmatprep.subr.bf16.mxu0 0
          %1499 = vmatpush1.bf16.msra.mxu0 0
          %1500 = vmatprep.subr.bf16.mxu0 0
          %1501 = vmatpush1.bf16.msra.mxu0 0
          %1502 = vmatprep.subr.bf16.mxu0 0
          %1503 = vmatpush1.bf16.msra.mxu0 0
          %1504 = vmatprep.subr.bf16.mxu0 0
          %1505 = vmatpush1.bf16.msra.mxu0 0
          %1506 = vmatprep.subr.bf16.mxu0 0
          %1507 = vmatpush1.bf16.msra.mxu0 0
          %1508 = vmatprep.mubr.bf16.mxu0 0
          %1509 = vmatmul.mubr.bf16.gmra.mrb[0].mxu0 %v1377
          %v1510 = vpop.f32.mrb[0].mxu0
          %v1511 = vadd.f32 %v1198, %v1510
          %v1512 = vpop.f32.mrb[0].mxu0
          %v1513 = vpop.f32.mrb[0].mxu0
          %v1514 = vadd.f32 %v1198, %v1513
          %v1515 = vpop.f32.mrb[0].mxu0
          %1516 = vmatprep.mubr.bf16.mxu0 0
          %1517 = vmatmul.mubr.bf16.gmra.mrb[0].mxu0 %v1380
          %v1518 = vpop.f32.mrb[0].mxu0
          %v1519 = vadd.f32 %v1198, %v1518
          %v1520 = vpop.f32.mrb[0].mxu0
          %v1521 = vpop.f32.mrb[0].mxu0
          %v1522 = vadd.f32 %v1198, %v1521
          %v1523 = vpop.f32.mrb[0].mxu0
          %1524 = vmatprep.mubr.bf16.mxu0 0
          %1525 = vmatmul.mubr.bf16.gmra.mrb[0].mxu0 %v1383
          %v1526 = vpop.f32.mrb[0].mxu0
          %v1527 = vadd.f32 %v1198, %v1526
          %v1528 = vpop.f32.mrb[0].mxu0
          %v1529 = vpop.f32.mrb[0].mxu0
          %v1530 = vadd.f32 %v1198, %v1529
          %v1531 = vpop.f32.mrb[0].mxu0
          %1532 = vmatprep.mubr.bf16.mxu0 0
          %1533 = vmatmul.mubr.bf16.gmra.mrb[0].mxu0 %v1386
          %v1534 = vpop.f32.mrb[0].mxu0
          %v1535 = vadd.f32 %v1198, %v1534
          %v1536 = vpop.f32.mrb[0].mxu0
          %v1537 = vpop.f32.mrb[0].mxu0
          %v1538 = vadd.f32 %v1198, %v1537
          %v1539 = vpop.f32.mrb[0].mxu0
          %1540 = vmatprep.mubr.bf16.mxu0 0
          %1541 = vmatmul.mubr.bf16.gmra.mrb[0].mxu0 %v1389
          %v1542 = vpop.f32.mrb[0].mxu0
          %v1543 = vadd.f32 %v1198, %v1542
          %v1544 = vpop.f32.mrb[0].mxu0
          %v1545 = vpop.f32.mrb[0].mxu0
          %v1546 = vadd.f32 %v1198, %v1545
          %v1547 = vpop.f32.mrb[0].mxu0
          %1548 = vmatprep.mubr.bf16.mxu0 0
          %1549 = vmatmul.mubr.bf16.gmra.mrb[0].mxu0 %v1392
          %v1550 = vpop.f32.mrb[0].mxu0
          %v1551 = vadd.f32 %v1198, %v1550
          %v1552 = vpop.f32.mrb[0].mxu0
          %v1553 = vpop.f32.mrb[0].mxu0
          %v1554 = vadd.f32 %v1198, %v1553
          %v1555 = vpop.f32.mrb[0].mxu0
          %1556 = vmatprep.mubr.bf16.mxu0 0
          %1557 = vmatmul.mubr.bf16.gmra.mrb[0].mxu0 %v1395
          %v1558 = vpop.f32.mrb[0].mxu0
          %v1559 = vadd.f32 %v1198, %v1558
          %v1560 = vpop.f32.mrb[0].mxu0
          %v1561 = vpop.f32.mrb[0].mxu0
          %v1562 = vadd.f32 %v1198, %v1561
          %v1563 = vpop.f32.mrb[0].mxu0
          %1564 = vmatprep.mubr.bf16.mxu0 0
          %1565 = vmatmul.mubr.bf16.gmra.mrb[0].mxu0 %v1398
          %v1566 = vpop.f32.mrb[0].mxu0
          %v1567 = vadd.f32 %v1198, %v1566
          %v1568 = vpop.f32.mrb[0].mxu0
          %v1569 = vpop.f32.mrb[0].mxu0
          %v1570 = vadd.f32 %v1198, %v1569
          %v1571 = vpop.f32.mrb[0].mxu0
          %1572 = vmatprep.mubr.bf16.mxu0 0
          %1573 = vmatmul.mubr.bf16.gmra.mrb[0].mxu0 %v1401
          %v1574 = vpop.f32.mrb[0].mxu0
          %v1575 = vadd.f32 %v1198, %v1574
          %v1576 = vpop.f32.mrb[0].mxu0
          %v1577 = vpop.f32.mrb[0].mxu0
          %v1578 = vadd.f32 %v1198, %v1577
          %v1579 = vpop.f32.mrb[0].mxu0
          %1580 = vmatprep.mubr.bf16.mxu0 0
          %1581 = vmatmul.mubr.bf16.gmra.mrb[0].mxu0 %v1404
          %v1582 = vpop.f32.mrb[0].mxu0
          %v1583 = vadd.f32 %v1198, %v1582
          %v1584 = vpop.f32.mrb[0].mxu0
          %v1585 = vpop.f32.mrb[0].mxu0
          %v1586 = vadd.f32 %v1198, %v1585
          %v1587 = vpop.f32.mrb[0].mxu0
          %1588 = vmatprep.mubr.bf16.mxu0 0
          %1589 = vmatmul.mubr.bf16.gmra.mrb[0].mxu0 %v1407
          %v1590 = vpop.f32.mrb[0].mxu0
          %v1591 = vadd.f32 %v1198, %v1590
          %v1592 = vpop.f32.mrb[0].mxu0
          %v1593 = vpop.f32.mrb[0].mxu0
          %v1594 = vadd.f32 %v1198, %v1593
          %v1595 = vpop.f32.mrb[0].mxu0
          %1596 = vmatprep.mubr.bf16.mxu0 0
          %1597 = vmatmul.mubr.bf16.gmra.mrb[0].mxu0 %v1410
          %v1598 = vpop.f32.mrb[0].mxu0
          %v1599 = vadd.f32 %v1198, %v1598
          %v1600 = vpop.f32.mrb[0].mxu0
          %v1601 = vpop.f32.mrb[0].mxu0
          %v1602 = vadd.f32 %v1198, %v1601
          %v1603 = vpop.f32.mrb[0].mxu0
          %1604 = vmatprep.mubr.bf16.mxu0 0
          %1605 = vmatmul.mubr.bf16.gmra.mrb[0].mxu0 %v1413
          %v1606 = vpop.f32.mrb[0].mxu0
          %v1607 = vadd.f32 %v1198, %v1606
          %v1608 = vpop.f32.mrb[0].mxu0
          %v1609 = vpop.f32.mrb[0].mxu0
          %v1610 = vadd.f32 %v1198, %v1609
          %v1611 = vpop.f32.mrb[0].mxu0
          %1612 = vmatprep.mubr.bf16.mxu0 0
          %1613 = vmatmul.mubr.bf16.gmra.mrb[0].mxu0 %v1416
          %v1614 = vpop.f32.mrb[0].mxu0
          %v1615 = vadd.f32 %v1198, %v1614
          %v1616 = vpop.f32.mrb[0].mxu0
          %v1617 = vpop.f32.mrb[0].mxu0
          %v1618 = vadd.f32 %v1198, %v1617
          %v1619 = vpop.f32.mrb[0].mxu0
          %1620 = vmatprep.mubr.bf16.mxu0 0
          %1621 = vmatmul.mubr.bf16.gmra.mrb[0].mxu0 %v1419
          %v1622 = vpop.f32.mrb[0].mxu0
          %v1623 = vadd.f32 %v1198, %v1622
          %v1624 = vpop.f32.mrb[0].mxu0
          %v1625 = vpop.f32.mrb[0].mxu0
          %v1626 = vadd.f32 %v1198, %v1625
          %v1627 = vpop.f32.mrb[0].mxu0
          %1628 = vmatprep.mubr.bf16.mxu0 0
          %1629 = vmatmul.mubr.bf16.gmra.mrb[0].mxu0 %v1422
          %v1630 = vpop.f32.mrb[0].mxu0
          %v1631 = vadd.f32 %v1198, %v1630
          %v1632 = vpop.f32.mrb[0].mxu0
          %v1633 = vpop.f32.mrb[0].mxu0
          %v1634 = vadd.f32 %v1198, %v1633
          %v1635 = vpop.f32.mrb[0].mxu0
          %1636 = vmatprep.mubr.bf16.mxu0 0
          %1637 = vmatmul.mubr.bf16.gmra.mrb[0].mxu0 %v1425
          %v1638 = vpop.f32.mrb[0].mxu0
          %v1639 = vadd.f32 %v1198, %v1638
          %v1640 = vpop.f32.mrb[0].mxu0
          %v1641 = vpop.f32.mrb[0].mxu0
          %v1642 = vadd.f32 %v1198, %v1641
          %v1643 = vpop.f32.mrb[0].mxu0
          %1644 = vmatprep.mubr.bf16.mxu0 0
          %1645 = vmatmul.mubr.bf16.gmra.mrb[0].mxu0 %v1428
          %v1646 = vpop.f32.mrb[0].mxu0
          %v1647 = vadd.f32 %v1198, %v1646
          %v1648 = vpop.f32.mrb[0].mxu0
          %v1649 = vpop.f32.mrb[0].mxu0
          %v1650 = vadd.f32 %v1198, %v1649
          %v1651 = vpop.f32.mrb[0].mxu0
          %1652 = vmatprep.mubr.bf16.mxu0 0
          %1653 = vmatmul.mubr.bf16.gmra.mrb[0].mxu0 %v1431
          %v1654 = vpop.f32.mrb[0].mxu0
          %v1655 = vadd.f32 %v1198, %v1654
          %v1656 = vpop.f32.mrb[0].mxu0
          %v1657 = vpop.f32.mrb[0].mxu0
          %v1658 = vadd.f32 %v1198, %v1657
          %v1659 = vpop.f32.mrb[0].mxu0
          %1660 = vmatprep.mubr.bf16.mxu0 0
          %1661 = vmatmul.mubr.bf16.gmra.mrb[0].mxu0 %v1434
          %v1662 = vpop.f32.mrb[0].mxu0
          %v1663 = vadd.f32 %v1198, %v1662
          %v1664 = vpop.f32.mrb[0].mxu0
          %v1665 = vpop.f32.mrb[0].mxu0
          %v1666 = vadd.f32 %v1198, %v1665
          %v1667 = vpop.f32.mrb[0].mxu0
          %1668 = vmatprep.mubr.bf16.mxu0 0
          %1669 = vmatmul.mubr.bf16.gmra.mrb[0].mxu0 %v1437
          %v1670 = vpop.f32.mrb[0].mxu0
          %v1671 = vadd.f32 %v1198, %v1670
          %v1672 = vpop.f32.mrb[0].mxu0
          %v1673 = vpop.f32.mrb[0].mxu0
          %v1674 = vadd.f32 %v1198, %v1673
          %v1675 = vpop.f32.mrb[0].mxu0
          %1676 = vmatprep.mubr.bf16.mxu0 0
          %1677 = vmatmul.mubr.bf16.gmra.mrb[0].mxu0 %v1440
          %v1678 = vpop.f32.mrb[0].mxu0
          %v1679 = vadd.f32 %v1198, %v1678
          %v1680 = vpop.f32.mrb[0].mxu0
          %v1681 = vpop.f32.mrb[0].mxu0
          %v1682 = vadd.f32 %v1198, %v1681
          %v1683 = vpop.f32.mrb[0].mxu0
          %1684 = vmatprep.mubr.bf16.mxu0 0
          %1685 = vmatmul.mubr.bf16.gmra.mrb[0].mxu0 %v1443
          %v1686 = vpop.f32.mrb[0].mxu0
          %v1687 = vadd.f32 %v1198, %v1686
          %v1688 = vpop.f32.mrb[0].mxu0
          %v1689 = vpop.f32.mrb[0].mxu0
          %v1690 = vadd.f32 %v1198, %v1689
          %v1691 = vpop.f32.mrb[0].mxu0
          %1692 = vmatprep.mubr.bf16.mxu0 0
          %1693 = vmatmul.mubr.bf16.gmra.mrb[0].mxu0 %v1446
          %v1694 = vpop.f32.mrb[0].mxu0
          %v1695 = vadd.f32 %v1198, %v1694
          %v1696 = vpop.f32.mrb[0].mxu0
          %v1697 = vpop.f32.mrb[0].mxu0
          %v1698 = vadd.f32 %v1198, %v1697
          %v1699 = vpop.f32.mrb[0].mxu0
          %1700 = vmatprep.mubr.bf16.mxu0 0
          %1701 = vmatmul.mubr.bf16.gmra.mrb[0].mxu0 %v1449
          %v1702 = vpop.f32.mrb[0].mxu0
          %v1703 = vadd.f32 %v1198, %v1702
          %v1704 = vpop.f32.mrb[0].mxu0
          %v1705 = vpop.f32.mrb[0].mxu0
          %v1706 = vadd.f32 %v1198, %v1705
          %v1707 = vpop.f32.mrb[0].mxu0
          %1708 = vmatprep.mubr.bf16.mxu0 0
          %1709 = vmatmul.mubr.bf16.gmra.mrb[0].mxu0 %v1452
          %v1710 = vpop.f32.mrb[0].mxu0
          %v1711 = vadd.f32 %v1198, %v1710
          %v1712 = vpop.f32.mrb[0].mxu0
          %v1713 = vpop.f32.mrb[0].mxu0
          %v1714 = vadd.f32 %v1198, %v1713
          %v1715 = vpop.f32.mrb[0].mxu0
          %1716 = vmatprep.mubr.bf16.mxu0 0
          %1717 = vmatmul.mubr.bf16.gmra.mrb[0].mxu0 %v1455
          %v1718 = vpop.f32.mrb[0].mxu0
          %v1719 = vadd.f32 %v1198, %v1718
          %v1720 = vpop.f32.mrb[0].mxu0
          %v1721 = vpop.f32.mrb[0].mxu0
          %v1722 = vadd.f32 %v1198, %v1721
          %v1723 = vpop.f32.mrb[0].mxu0
          %1724 = vmatprep.mubr.bf16.mxu0 0
          %1725 = vmatmul.mubr.bf16.gmra.mrb[0].mxu0 %v1458
          %v1726 = vpop.f32.mrb[0].mxu0
          %v1727 = vadd.f32 %v1198, %v1726
          %v1728 = vpop.f32.mrb[0].mxu0
          %v1729 = vpop.f32.mrb[0].mxu0
          %v1730 = vadd.f32 %v1198, %v1729
          %v1731 = vpop.f32.mrb[0].mxu0
          %1732 = vmatprep.mubr.bf16.mxu0 0
          %1733 = vmatmul.mubr.bf16.gmra.mrb[0].mxu0 %v1461
          %v1734 = vpop.f32.mrb[0].mxu0
          %v1735 = vadd.f32 %v1198, %v1734
          %v1736 = vpop.f32.mrb[0].mxu0
          %v1737 = vpop.f32.mrb[0].mxu0
          %v1738 = vadd.f32 %v1198, %v1737
          %v1739 = vpop.f32.mrb[0].mxu0
          %1740 = vmatprep.mubr.bf16.mxu0 0
          %1741 = vmatmul.mubr.bf16.gmra.mrb[0].mxu0 %v1464
          %v1742 = vpop.f32.mrb[0].mxu0
          %v1743 = vadd.f32 %v1198, %v1742
          %v1744 = vpop.f32.mrb[0].mxu0
          %v1745 = vpop.f32.mrb[0].mxu0
          %v1746 = vadd.f32 %v1198, %v1745
          %v1747 = vpop.f32.mrb[0].mxu0
          %1748 = vmatprep.mubr.bf16.mxu0 0
          %1749 = vmatmul.mubr.bf16.gmra.mrb[0].mxu0 %v1467
          %v1750 = vpop.f32.mrb[0].mxu0
          %v1751 = vadd.f32 %v1198, %v1750
          %v1752 = vpop.f32.mrb[0].mxu0
          %v1753 = vpop.f32.mrb[0].mxu0
          %v1754 = vadd.f32 %v1198, %v1753
          %v1755 = vpop.f32.mrb[0].mxu0
          %1756 = vmatprep.mubr.bf16.mxu0 0
          %1757 = vmatmul.mubr.bf16.gmra.mrb[0].mxu0 %v1470
          %v1758 = vpop.f32.mrb[0].mxu0
          %v1759 = vadd.f32 %v1198, %v1758
          %v1760 = vpop.f32.mrb[0].mxu0
          %v1761 = vpop.f32.mrb[0].mxu0
          %v1762 = vadd.f32 %v1198, %v1761
          %v1763 = vpop.f32.mrb[0].mxu0
          %1764 = vdwg.mxu0
          %v1765 = vld [vmem:[#allocation3] sm:$0x1]
          %v1766 = vlaneseq
          %v1767 = vshrl.u32 %v1766, 7
          %v1768 = vsub.s32 0, %v1767
          %v1769 = vrot.slane %v1765, %v1768
          %v1770 = vmul.f32 %v1511, %v1769
          %v1771 = vmul.f32 %v1514, %v1769
          %v1772 = vmul.f32 %v1519, %v1769
          %v1773 = vmul.f32 %v1522, %v1769
          %v1774 = vmul.f32 %v1527, %v1769
          %v1775 = vmul.f32 %v1530, %v1769
          %v1776 = vmul.f32 %v1535, %v1769
          %v1777 = vmul.f32 %v1538, %v1769
          %v1778 = vmul.f32 %v1543, %v1769
          %v1779 = vmul.f32 %v1546, %v1769
          %v1780 = vmul.f32 %v1551, %v1769
          %v1781 = vmul.f32 %v1554, %v1769
          %v1782 = vmul.f32 %v1559, %v1769
          %v1783 = vmul.f32 %v1562, %v1769
          %v1784 = vmul.f32 %v1567, %v1769
          %v1785 = vmul.f32 %v1570, %v1769
          %v1786 = vmul.f32 %v1575, %v1769
          %v1787 = vmul.f32 %v1578, %v1769
          %v1788 = vmul.f32 %v1583, %v1769
          %v1789 = vmul.f32 %v1586, %v1769
          %v1790 = vmul.f32 %v1591, %v1769
          %v1791 = vmul.f32 %v1594, %v1769
          %v1792 = vmul.f32 %v1599, %v1769
          %v1793 = vmul.f32 %v1602, %v1769
          %v1794 = vmul.f32 %v1607, %v1769
          %v1795 = vmul.f32 %v1610, %v1769
          %v1796 = vmul.f32 %v1615, %v1769
          %v1797 = vmul.f32 %v1618, %v1769
          %v1798 = vmul.f32 %v1623, %v1769
          %v1799 = vmul.f32 %v1626, %v1769
          %v1800 = vmul.f32 %v1631, %v1769
          %v1801 = vmul.f32 %v1634, %v1769
          %v1802 = vmul.f32 %v1639, %v1769
          %v1803 = vmul.f32 %v1642, %v1769
          %v1804 = vmul.f32 %v1647, %v1769
          %v1805 = vmul.f32 %v1650, %v1769
          %v1806 = vmul.f32 %v1655, %v1769
          %v1807 = vmul.f32 %v1658, %v1769
          %v1808 = vmul.f32 %v1663, %v1769
          %v1809 = vmul.f32 %v1666, %v1769
          %v1810 = vmul.f32 %v1671, %v1769
          %v1811 = vmul.f32 %v1674, %v1769
          %v1812 = vmul.f32 %v1679, %v1769
          %v1813 = vmul.f32 %v1682, %v1769
          %v1814 = vmul.f32 %v1687, %v1769
          %v1815 = vmul.f32 %v1690, %v1769
          %v1816 = vmul.f32 %v1695, %v1769
          %v1817 = vmul.f32 %v1698, %v1769
          %v1818 = vmul.f32 %v1703, %v1769
          %v1819 = vmul.f32 %v1706, %v1769
          %v1820 = vmul.f32 %v1711, %v1769
          %v1821 = vmul.f32 %v1714, %v1769
          %v1822 = vmul.f32 %v1719, %v1769
          %v1823 = vmul.f32 %v1722, %v1769
          %v1824 = vmul.f32 %v1727, %v1769
          %v1825 = vmul.f32 %v1730, %v1769
          %v1826 = vmul.f32 %v1735, %v1769
          %v1827 = vmul.f32 %v1738, %v1769
          %v1828 = vmul.f32 %v1743, %v1769
          %v1829 = vmul.f32 %v1746, %v1769
          %v1830 = vmul.f32 %v1751, %v1769
          %v1831 = vmul.f32 %v1754, %v1769
          %v1832 = vmul.f32 %v1759, %v1769
          %v1833 = vmul.f32 %v1762, %v1769
          %v1834 = vld [vmem:[#allocation3 + $0x1] sm:$0x1]
          %v1835 = vlaneseq
          %v1836 = vshrl.u32 %v1835, 7
          %v1837 = vsub.s32 0, %v1836
          %v1838 = vrot.slane %v1834, %v1837
          %v1839 = vadd.f32 %v1770, %v1838
          %v1840 = vadd.f32 %v1771, %v1838
          %v1841 = vadd.f32 %v1772, %v1838
          %v1842 = vadd.f32 %v1773, %v1838
          %v1843 = vadd.f32 %v1774, %v1838
          %v1844 = vadd.f32 %v1775, %v1838
          %v1845 = vadd.f32 %v1776, %v1838
          %v1846 = vadd.f32 %v1777, %v1838
          %v1847 = vadd.f32 %v1778, %v1838
          %v1848 = vadd.f32 %v1779, %v1838
          %v1849 = vadd.f32 %v1780, %v1838
          %v1850 = vadd.f32 %v1781, %v1838
          %v1851 = vadd.f32 %v1782, %v1838
          %v1852 = vadd.f32 %v1783, %v1838
          %v1853 = vadd.f32 %v1784, %v1838
          %v1854 = vadd.f32 %v1785, %v1838
          %v1855 = vadd.f32 %v1786, %v1838
          %v1856 = vadd.f32 %v1787, %v1838
          %v1857 = vadd.f32 %v1788, %v1838
          %v1858 = vadd.f32 %v1789, %v1838
          %v1859 = vadd.f32 %v1790, %v1838
          %v1860 = vadd.f32 %v1791, %v1838
          %v1861 = vadd.f32 %v1792, %v1838
          %v1862 = vadd.f32 %v1793, %v1838
          %v1863 = vadd.f32 %v1794, %v1838
          %v1864 = vadd.f32 %v1795, %v1838
          %v1865 = vadd.f32 %v1796, %v1838
          %v1866 = vadd.f32 %v1797, %v1838
          %v1867 = vadd.f32 %v1798, %v1838
          %v1868 = vadd.f32 %v1799, %v1838
          %v1869 = vadd.f32 %v1800, %v1838
          %v1870 = vadd.f32 %v1801, %v1838
          %v1871 = vadd.f32 %v1802, %v1838
          %v1872 = vadd.f32 %v1803, %v1838
          %v1873 = vadd.f32 %v1804, %v1838
          %v1874 = vadd.f32 %v1805, %v1838
          %v1875 = vadd.f32 %v1806, %v1838
          %v1876 = vadd.f32 %v1807, %v1838
          %v1877 = vadd.f32 %v1808, %v1838
          %v1878 = vadd.f32 %v1809, %v1838
          %v1879 = vadd.f32 %v1810, %v1838
          %v1880 = vadd.f32 %v1811, %v1838
          %v1881 = vadd.f32 %v1812, %v1838
          %v1882 = vadd.f32 %v1813, %v1838
          %v1883 = vadd.f32 %v1814, %v1838
          %v1884 = vadd.f32 %v1815, %v1838
          %v1885 = vadd.f32 %v1816, %v1838
          %v1886 = vadd.f32 %v1817, %v1838
          %v1887 = vadd.f32 %v1818, %v1838
          %v1888 = vadd.f32 %v1819, %v1838
          %v1889 = vadd.f32 %v1820, %v1838
          %v1890 = vadd.f32 %v1821, %v1838
          %v1891 = vadd.f32 %v1822, %v1838
          %v1892 = vadd.f32 %v1823, %v1838
          %v1893 = vadd.f32 %v1824, %v1838
          %v1894 = vadd.f32 %v1825, %v1838
          %v1895 = vadd.f32 %v1826, %v1838
          %v1896 = vadd.f32 %v1827, %v1838
          %v1897 = vadd.f32 %v1828, %v1838
          %v1898 = vadd.f32 %v1829, %v1838
          %v1899 = vadd.f32 %v1830, %v1838
          %v1900 = vadd.f32 %v1831, %v1838
          %v1901 = vadd.f32 %v1832, %v1838
          %v1902 = vadd.f32 %v1833, %v1838
          %v1903 = vmax.f32 %v1839, 0.0
          %v1904 = vmax.f32 %v1840, 0.0
          %v1905 = vmax.f32 %v1841, 0.0
          %v1906 = vmax.f32 %v1842, 0.0
          %v1907 = vmax.f32 %v1843, 0.0
          %v1908 = vmax.f32 %v1844, 0.0
          %v1909 = vmax.f32 %v1845, 0.0
          %v1910 = vmax.f32 %v1846, 0.0
          %v1911 = vmax.f32 %v1847, 0.0
          %v1912 = vmax.f32 %v1848, 0.0
          %v1913 = vmax.f32 %v1849, 0.0
          %v1914 = vmax.f32 %v1850, 0.0
          %v1915 = vmax.f32 %v1851, 0.0
          %v1916 = vmax.f32 %v1852, 0.0
          %v1917 = vmax.f32 %v1853, 0.0
          %v1918 = vmax.f32 %v1854, 0.0
          %v1919 = vmax.f32 %v1855, 0.0
          %v1920 = vmax.f32 %v1856, 0.0
          %v1921 = vmax.f32 %v1857, 0.0
          %v1922 = vmax.f32 %v1858, 0.0
          %v1923 = vmax.f32 %v1859, 0.0
          %v1924 = vmax.f32 %v1860, 0.0
          %v1925 = vmax.f32 %v1861, 0.0
          %v1926 = vmax.f32 %v1862, 0.0
          %v1927 = vmax.f32 %v1863, 0.0
          %v1928 = vmax.f32 %v1864, 0.0
          %v1929 = vmax.f32 %v1865, 0.0
          %v1930 = vmax.f32 %v1866, 0.0
          %v1931 = vmax.f32 %v1867, 0.0
          %v1932 = vmax.f32 %v1868, 0.0
          %v1933 = vmax.f32 %v1869, 0.0
          %v1934 = vmax.f32 %v1870, 0.0
          %v1935 = vmax.f32 %v1871, 0.0
          %v1936 = vmax.f32 %v1872, 0.0
          %v1937 = vmax.f32 %v1873, 0.0
          %v1938 = vmax.f32 %v1874, 0.0
          %v1939 = vmax.f32 %v1875, 0.0
          %v1940 = vmax.f32 %v1876, 0.0
          %v1941 = vmax.f32 %v1877, 0.0
          %v1942 = vmax.f32 %v1878, 0.0
          %v1943 = vmax.f32 %v1879, 0.0
          %v1944 = vmax.f32 %v1880, 0.0
          %v1945 = vmax.f32 %v1881, 0.0
          %v1946 = vmax.f32 %v1882, 0.0
          %v1947 = vmax.f32 %v1883, 0.0
          %v1948 = vmax.f32 %v1884, 0.0
          %v1949 = vmax.f32 %v1885, 0.0
          %v1950 = vmax.f32 %v1886, 0.0
          %v1951 = vmax.f32 %v1887, 0.0
          %v1952 = vmax.f32 %v1888, 0.0
          %v1953 = vmax.f32 %v1889, 0.0
          %v1954 = vmax.f32 %v1890, 0.0
          %v1955 = vmax.f32 %v1891, 0.0
          %v1956 = vmax.f32 %v1892, 0.0
          %v1957 = vmax.f32 %v1893, 0.0
          %v1958 = vmax.f32 %v1894, 0.0
          %v1959 = vmax.f32 %v1895, 0.0
          %v1960 = vmax.f32 %v1896, 0.0
          %v1961 = vmax.f32 %v1897, 0.0
          %v1962 = vmax.f32 %v1898, 0.0
          %v1963 = vmax.f32 %v1899, 0.0
          %v1964 = vmax.f32 %v1900, 0.0
          %v1965 = vmax.f32 %v1901, 0.0
          %v1966 = vmax.f32 %v1902, 0.0
          %1967 = vxpose.xlu0.b32.start [1/16] %v1903, 128
          %1968 = vxpose.xlu0.b32.cont [2/16] %v1904, 128
          %1969 = vxpose.xlu0.b32.cont [3/16] %v1905, 128
          %1970 = vxpose.xlu0.b32.cont [4/16] %v1906, 128
          %1971 = vxpose.xlu0.b32.cont [5/16] %v1907, 128
          %1972 = vxpose.xlu0.b32.cont [6/16] %v1908, 128
          %1973 = vxpose.xlu0.b32.cont [7/16] %v1909, 128
          %1974 = vxpose.xlu0.b32.cont [8/16] %v1910, 128
          %1975 = vxpose.xlu0.b32.cont [9/16] %v1911, 128
          %1976 = vxpose.xlu0.b32.cont [10/16] %v1912, 128
          %1977 = vxpose.xlu0.b32.cont [11/16] %v1913, 128
          %1978 = vxpose.xlu0.b32.cont [12/16] %v1914, 128
          %1979 = vxpose.xlu0.b32.cont [13/16] %v1915, 128
          %1980 = vxpose.xlu0.b32.cont [14/16] %v1916, 128
          %1981 = vxpose.xlu0.b32.cont [15/16] %v1917, 128
          %1982 = vxpose.xlu0.b32.end [16/16] %v1918, 128
          %v1983 = vpop.trf.xlu0
          %v1984 = vpop.trf.xlu0
          %v1985 = vpop.trf.xlu0
          %v1986 = vpop.trf.xlu0
          %v1987 = vpop.trf.xlu0
          %v1988 = vpop.trf.xlu0
          %v1989 = vpop.trf.xlu0
          %v1990 = vpop.trf.xlu0
          %v1991 = vpop.trf.xlu0
          %v1992 = vpop.trf.xlu0
          %v1993 = vpop.trf.xlu0
          %v1994 = vpop.trf.xlu0
          %v1995 = vpop.trf.xlu0
          %v1996 = vpop.trf.xlu0
          %v1997 = vpop.trf.xlu0
          %v1998 = vpop.trf.xlu0
          %1999 = vxpose.xlu0.b32.start [1/16] %v1919, 128
          %2000 = vxpose.xlu0.b32.cont [2/16] %v1920, 128
          %2001 = vxpose.xlu0.b32.cont [3/16] %v1921, 128
          %2002 = vxpose.xlu0.b32.cont [4/16] %v1922, 128
          %2003 = vxpose.xlu0.b32.cont [5/16] %v1923, 128
          %2004 = vxpose.xlu0.b32.cont [6/16] %v1924, 128
          %2005 = vxpose.xlu0.b32.cont [7/16] %v1925, 128
          %2006 = vxpose.xlu0.b32.cont [8/16] %v1926, 128
          %2007 = vxpose.xlu0.b32.cont [9/16] %v1927, 128
          %2008 = vxpose.xlu0.b32.cont [10/16] %v1928, 128
          %2009 = vxpose.xlu0.b32.cont [11/16] %v1929, 128
          %2010 = vxpose.xlu0.b32.cont [12/16] %v1930, 128
          %2011 = vxpose.xlu0.b32.cont [13/16] %v1931, 128
          %2012 = vxpose.xlu0.b32.cont [14/16] %v1932, 128
          %2013 = vxpose.xlu0.b32.cont [15/16] %v1933, 128
          %2014 = vxpose.xlu0.b32.end [16/16] %v1934, 128
          %v2015 = vpop.trf.xlu0
          %v2016 = vpop.trf.xlu0
          %v2017 = vpop.trf.xlu0
          %v2018 = vpop.trf.xlu0
          %v2019 = vpop.trf.xlu0
          %v2020 = vpop.trf.xlu0
          %v2021 = vpop.trf.xlu0
          %v2022 = vpop.trf.xlu0
          %v2023 = vpop.trf.xlu0
          %v2024 = vpop.trf.xlu0
          %v2025 = vpop.trf.xlu0
          %v2026 = vpop.trf.xlu0
          %v2027 = vpop.trf.xlu0
          %v2028 = vpop.trf.xlu0
          %v2029 = vpop.trf.xlu0
          %v2030 = vpop.trf.xlu0
          %2031 = vxpose.xlu0.b32.start [1/16] %v1935, 128
          %2032 = vxpose.xlu0.b32.cont [2/16] %v1936, 128
          %2033 = vxpose.xlu0.b32.cont [3/16] %v1937, 128
          %2034 = vxpose.xlu0.b32.cont [4/16] %v1938, 128
          %2035 = vxpose.xlu0.b32.cont [5/16] %v1939, 128
          %2036 = vxpose.xlu0.b32.cont [6/16] %v1940, 128
          %2037 = vxpose.xlu0.b32.cont [7/16] %v1941, 128
          %2038 = vxpose.xlu0.b32.cont [8/16] %v1942, 128
          %2039 = vxpose.xlu0.b32.cont [9/16] %v1943, 128
          %2040 = vxpose.xlu0.b32.cont [10/16] %v1944, 128
          %2041 = vxpose.xlu0.b32.cont [11/16] %v1945, 128
          %2042 = vxpose.xlu0.b32.cont [12/16] %v1946, 128
          %2043 = vxpose.xlu0.b32.cont [13/16] %v1947, 128
          %2044 = vxpose.xlu0.b32.cont [14/16] %v1948, 128
          %2045 = vxpose.xlu0.b32.cont [15/16] %v1949, 128
          %2046 = vxpose.xlu0.b32.end [16/16] %v1950, 128
          %v2047 = vpop.trf.xlu0
          %v2048 = vpop.trf.xlu0
          %v2049 = vpop.trf.xlu0
          %v2050 = vpop.trf.xlu0
          %v2051 = vpop.trf.xlu0
          %v2052 = vpop.trf.xlu0
          %v2053 = vpop.trf.xlu0
          %v2054 = vpop.trf.xlu0
          %v2055 = vpop.trf.xlu0
          %v2056 = vpop.trf.xlu0
          %v2057 = vpop.trf.xlu0
          %v2058 = vpop.trf.xlu0
          %v2059 = vpop.trf.xlu0
          %v2060 = vpop.trf.xlu0
          %v2061 = vpop.trf.xlu0
          %v2062 = vpop.trf.xlu0
          %2063 = vxpose.xlu0.b32.start [1/16] %v1951, 128
          %2064 = vxpose.xlu0.b32.cont [2/16] %v1952, 128
          %2065 = vxpose.xlu0.b32.cont [3/16] %v1953, 128
          %2066 = vxpose.xlu0.b32.cont [4/16] %v1954, 128
          %2067 = vxpose.xlu0.b32.cont [5/16] %v1955, 128
          %2068 = vxpose.xlu0.b32.cont [6/16] %v1956, 128
          %2069 = vxpose.xlu0.b32.cont [7/16] %v1957, 128
          %2070 = vxpose.xlu0.b32.cont [8/16] %v1958, 128
          %2071 = vxpose.xlu0.b32.cont [9/16] %v1959, 128
          %2072 = vxpose.xlu0.b32.cont [10/16] %v1960, 128
          %2073 = vxpose.xlu0.b32.cont [11/16] %v1961, 128
          %2074 = vxpose.xlu0.b32.cont [12/16] %v1962, 128
          %2075 = vxpose.xlu0.b32.cont [13/16] %v1963, 128
          %2076 = vxpose.xlu0.b32.cont [14/16] %v1964, 128
          %2077 = vxpose.xlu0.b32.cont [15/16] %v1965, 128
          %2078 = vxpose.xlu0.b32.end [16/16] %v1966, 128
          %v2079 = vpop.trf.xlu0
          %v2080 = vpop.trf.xlu0
          %v2081 = vpop.trf.xlu0
          %v2082 = vpop.trf.xlu0
          %v2083 = vpop.trf.xlu0
          %v2084 = vpop.trf.xlu0
          %v2085 = vpop.trf.xlu0
          %v2086 = vpop.trf.xlu0
          %v2087 = vpop.trf.xlu0
          %v2088 = vpop.trf.xlu0
          %v2089 = vpop.trf.xlu0
          %v2090 = vpop.trf.xlu0
          %v2091 = vpop.trf.xlu0
          %v2092 = vpop.trf.xlu0
          %v2093 = vpop.trf.xlu0
          %v2094 = vpop.trf.xlu0
          %2095 = vst [vmem:[%s232] sm:$0xff] %v1983
          %2096 = vst [vmem:[%s232 + $0x8] sm:$0xff] %v2015
          %s2097 = scalar_lea.vmem %s232, 16 [#allocation4]
          %2098 = vst [vmem:[%s2097] sm:$0xff] %v2047
          %2099 = vst [vmem:[%s2097 + $0x8] sm:$0xff] %v2079
        $region52: #{tpu_custom_call.1} parent=39 // pred_fallthru
          _
        %s2100 = sand.u32 %s151, 1
        %s2101 = scalar_lea.sflag [#allocation5], %s2100
        %s2102 = sand.u32 %s151, 1
        %s2103 = smul.addr %s2102, 32
        %s2104 = scalar_lea.vmem [#allocation4], %s2103
        // Predicated region
        $region57: #{tpu_custom_call.1} parent=39 // pred_check
          %p2105 = pneg %p161
        $region58: #{tpu_custom_call.1} parent=39 // pred_check_branch
          %2107 = sbr.rel (%p2105) target = $region60
        $region59: #{tpu_custom_call.1} parent=39 // pred_region
          %s2108 = smul.u32 %s24, %s23
          %s2109 = smul.u32 2, %s2108
          %s2111 = ssub.s32 512, 512
          %2112 = vsyncadd %s2101, %s2111
          %s2113 = smul.addr %s2109, 2
          %s2114 = smul.addr %s2113, 128
          %s2115 = scalar_lea.hbm %s5, %s2114
          %s2116 = sshll.u32 %s2104, 4
          %s2117 = int_to_ptr.vmem [resolvable:$true] %s2116
          %2122 = dma.vmem_to_hbm [thread:$0]  %s2117, 512, %s2115, %s2101, 256, 256, 16
        $region60: #{tpu_custom_call.1} parent=39 // pred_fallthru
          _
      $region40: #{tpu_custom_call.1} parent=5 // pred_fallthru
        _
      %p2123 = scmp.le.s32.totalorder 2, %s14
      // Predicated region
      $region61: #{tpu_custom_call.1} parent=5 // pred_check
        %p2124 = pneg %p2123
      $region62: #{tpu_custom_call.1} parent=5 // pred_check_branch
        %2126 = sbr.rel (%p2124) target = $region64
      $region63: #{tpu_custom_call.1} parent=5 // pred_region
        %s2127 = ssub.s32 %s14, 2
        // Predicated region
        $region65: #{tpu_custom_call.1} parent=63 // pred_check
          %p2128 = pneg %p167
        $region66: #{tpu_custom_call.1} parent=63 // pred_check_branch
          %2130 = sbr.rel (%p2128) target = $region68
        $region67: #{tpu_custom_call.1} parent=63 // pred_region
          %s2131 = sand.u32 %s152, 1
          %s2132 = scalar_lea.sflag [#allocation5], %s2131
          %s2133 = sand.u32 %s152, 1
          %s2134 = smul.addr %s2133, 32
          %s2135 = scalar_lea.vmem [#allocation4], %s2134
          %2136 = dma.done %s2132, 512
        $region68: #{tpu_custom_call.1} parent=63 // pred_fallthru
          _
      $region64: #{tpu_custom_call.1} parent=5 // pred_fallthru
        _
    $region6: #{tpu_custom_call.1} parent=1 // loop_footer
      %s18 = sadd.s32 1, %s14
    $region7: #{tpu_custom_call.1} parent=1 // loop_footer_branch
      %13 = sbr.rel target = $region3
    $region8: #{tpu_custom_call.1} parent=1 // loop_exit
      _
    %2137 = vsyncpa [#allocation5], 1
    %s2138 = scalar_lea.sflag [#allocation5], 1
    %2139 = vsyncpa %s2138, 1

</llo_original>
